<compile_context>
chip_gen: v6e
topology: v6e:2x2x1
jax: 0.10.0
libtpu: 0.0.40
codegen_flags: <defaults>
</compile_context>

<pallas_src>
import functools
import math

import jax
import jax.numpy as jnp
from jax.experimental import pallas as pl
from jax.experimental.pallas import tpu as pltpu

EPS = 1e-5


# ------------------------------- Pallas kernel --------------------------------------

def _patch_embed_kernel(x_ref, w_ref, b_ref, g_ref, bb_ref, o_ref, acc_ref, *,
                        eps, use_norm):
    """Fused (patches @ W) + bias [+ LayerNorm] with K-reduction accumulator.

    x_ref: (tm, tk) bf16, w_ref: (tk, N) bf16, b_ref/g_ref/bb_ref: (1, N) f32,
    o_ref: (tm, N) f32, acc_ref: (tm, N) f32 scratch.
    """
    k = pl.program_id(1)

    @pl.when(k == 0)
    def _init():
        acc_ref[...] = jnp.zeros_like(acc_ref)

    acc_ref[...] += jnp.dot(x_ref[...], w_ref[...],
                            preferred_element_type=jnp.float32)

    @pl.when(k == pl.num_programs(1) - 1)
    def _finalize():
        y = acc_ref[...] + b_ref[...]                 # bias added exactly once
        if use_norm:                                  # fused LayerNorm epilogue (f32)
            mu = jnp.mean(y, axis=-1, keepdims=True)
            yc = y - mu
            var = jnp.mean(yc * yc, axis=-1, keepdims=True)
            y = yc * jax.lax.rsqrt(var + eps) * g_ref[...] + bb_ref[...]
        o_ref[...] = y.astype(o_ref.dtype)


def _pick_row_tile(m, max_tile=512, align=8):
    """Largest divisor of m that is a multiple of 8 (or m itself), capped at max_tile."""
    for t in range(min(m, max_tile), 0, -1):
        if m % t == 0 and (t % align == 0 or t == m):
            return t
    return m


def _pick_k_tile(k, max_tile=512):
    """K tile must be a multiple of 128 or the full K (last-dim constraint on x blocks)."""
    if k > 128 and k % 128 == 0:
        for t in (max_tile, 384, 256, 128):
            if t <= k and k % t == 0:
                return t
    return k


def fused_patch_matmul_ln(patches, w, b, gamma, beta, *, use_norm, eps=EPS):
    """patches:(M,K) @ w:(K,N) + b, optionally LayerNorm over N.  Returns (M,N) f32."""
    M, K = patches.shape
    N = w.shape[1]
    tm = _pick_row_tile(M)
    tk = _pick_k_tile(K)

    x_bf = patches.astype(jnp.bfloat16)               # MXU operands in bf16
    w_bf = w.astype(jnp.bfloat16)
    b2 = b.reshape(1, N).astype(jnp.float32)
    g2 = gamma.reshape(1, N).astype(jnp.float32)
    bb2 = beta.reshape(1, N).astype(jnp.float32)

    kernel = functools.partial(_patch_embed_kernel, eps=eps, use_norm=use_norm)
    return pl.pallas_call(
        kernel,
        out_shape=jax.ShapeDtypeStruct((M, N), jnp.float32),
        grid_spec=pltpu.PrefetchScalarGridSpec(
            num_scalar_prefetch=0,
            grid=(M // tm, K // tk),
            in_specs=[
                pl.BlockSpec((tm, tk), lambda i, k: (i, k)),
                pl.BlockSpec((tk, N), lambda i, k: (k, 0)),
                pl.BlockSpec((1, N), lambda i, k: (0, 0)),
                pl.BlockSpec((1, N), lambda i, k: (0, 0)),
                pl.BlockSpec((1, N), lambda i, k: (0, 0)),
            ],
            out_specs=pl.BlockSpec((tm, N), lambda i, k: (i, 0)),
            scratch_shapes=[pltpu.VMEM((tm, N), jnp.float32)],
        ),
        compiler_params=pltpu.CompilerParams(
            dimension_semantics=("parallel", "arbitrary"),
            vmem_limit_bytes=32 * 1024 * 1024,        # sized for v7x's smaller VMEM
        ),
    )(x_bf, w_bf, b2, g2, bb2)


# ----------------------------- PatchEmbed forward ------------------------------------

def patch_embed_forward(params, x, *, patch_size, use_norm=True, eps=EPS):
    """x: (B, Cin, Z, X, Y) NCDHW f32 -> (B, gz, gx, gy, embed_dim) f32."""
    ps = patch_size
    B, Cin, z, xs, ys = x.shape
    if (z % ps) or (xs % ps) or (ys % ps):            # matches the reference F.pad
        x = jnp.pad(x, ((0, 0), (0, 0),
                        (0, ps - z % ps), (0, ps - xs % ps), (0, ps - ys % ps)))
        B, Cin, z, xs, ys = x.shape
    gz, gx, gy = z // ps, xs // ps, ys // ps

    # Strided Conv3d(k=stride=ps) == per-patch flatten (c, kz, kx, ky) @ W^T.
    xp = x.reshape(B, Cin, gz, ps, gx, ps, gy, ps)
    xp = jnp.transpose(xp, (0, 2, 4, 6, 1, 3, 5, 7))
    xp = xp.reshape(B * gz * gx * gy, Cin * ps ** 3)

    embed_dim = params['proj_w'].shape[0]
    w = params['proj_w'].reshape(embed_dim, Cin * ps ** 3).T        # (K, N)

    out = fused_patch_matmul_ln(xp, w, params['proj_b'],
                                params['norm_w'], params['norm_b'],
                                use_norm=use_norm, eps=eps)
    return out.reshape(B, gz, gx, gy, embed_dim)


# ---------------------------- pure-JAX reference (f32) -------------------------------

def patch_embed_reference(params, x, *, patch_size, use_norm=True, eps=EPS):
    ps = patch_size
    B, Cin, z, xs, ys = x.shape
    if (z % ps) or (xs % ps) or (ys % ps):
        x = jnp.pad(x, ((0, 0), (0, 0),
                        (0, ps - z % ps), (0, ps - xs % ps), (0, ps - ys % ps)))
    out = jax.lax.conv_general_dilated(
        x.astype(jnp.float32), params['proj_w'].astype(jnp.float32),
        window_strides=(ps, ps, ps), padding='VALID',
        dimension_numbers=('NCDHW', 'OIDHW', 'NCDHW'))
    out = out + params['proj_b'].reshape(1, -1, 1, 1, 1)
    out = jnp.transpose(out, (0, 2, 3, 4, 1))
    if use_norm:
        mu = jnp.mean(out, axis=-1, keepdims=True)
        var = jnp.mean((out - mu) ** 2, axis=-1, keepdims=True)
        out = (out - mu) * jax.lax.rsqrt(var + eps) * params['norm_w'] + params['norm_b']
    return out


# ===================================== main ==========================================

if __name__ == "__main__":
    key = jax.random.PRNGKey(0)
    kw, kb, kx = jax.random.split(key, 3)

    B, CIN, Z, X, Y = 2, 1, 16, 32, 64      # small volume; all dims divisible by PATCH
    PATCH = 4
    EMBED = 96                              # module default embed_dim

    params = {
        'proj_w': jax.random.normal(kw, (EMBED, CIN, PATCH, PATCH, PATCH), jnp.float32) * 0.02,
        'proj_b': jax.random.normal(kb, (EMBED,), jnp.float32) * 0.02,
        'norm_w': jnp.ones((EMBED,), jnp.float32),
        'norm_b': jnp.zeros((EMBED,), jnp.float32),
    }
    x = jax.random.normal(kx, (B, CIN, Z, X, Y), jnp.float32)

    # norm_layer=LayerNorm path (use_norm=True); norm_layer=None (Identity) also supported.
    fwd = jax.jit(functools.partial(patch_embed_forward, patch_size=PATCH, use_norm=True))
    out = jax.block_until_ready(fwd(params, x))

    assert out.shape == (B, Z // PATCH, X // PATCH, Y // PATCH, EMBED), out.shape
    assert bool(jnp.all(jnp.isfinite(out)))

    ref = patch_embed_reference(params, x, patch_size=PATCH, use_norm=True)
    max_err = float(jnp.max(jnp.abs(out - ref)))
    assert max_err < 5e-2, f"max abs err {max_err}"   # loose tol: bf16 MXU operands

    print("KERNEL_OK")
</pallas_src>

<mosaic_0001>
module attributes {stable_mosaic.version = 11 : i64} {
  func.func @_patch_embed_kernel(%arg0: i32, %arg1: i32, %arg2: memref<512x64xbf16, #tpu.memory_space<vmem>>, %arg3: memref<64x96xbf16, #tpu.memory_space<vmem>>, %arg4: memref<1x96xf32, #tpu.memory_space<vmem>>, %arg5: memref<1x96xf32, #tpu.memory_space<vmem>>, %arg6: memref<1x96xf32, #tpu.memory_space<vmem>>, %arg7: memref<512x96xf32, #tpu.memory_space<vmem>>, %arg8: memref<512x96xf32, #tpu.memory_space<vmem>>) attributes {dimension_semantics = [#tpu.dimension_semantics<parallel>, #tpu.dimension_semantics<arbitrary>], iteration_bounds = array<i64: 2, 1>, scalar_prefetch = 0 : i64, scratch_operands = 1 : i64, tpu.core_type = #tpu.core_type<tc>, window_params = [{transform_indices = @transform_0, window_bounds = array<i64: 512, 64>}, {transform_indices = @transform_1, window_bounds = array<i64: 64, 96>}, {pipeline_mode = #tpu.pipeline_mode<synchronous>, transform_indices = @transform_2, window_bounds = array<i64: 1, 96>}, {pipeline_mode = #tpu.pipeline_mode<synchronous>, transform_indices = @transform_3, window_bounds = array<i64: 1, 96>}, {pipeline_mode = #tpu.pipeline_mode<synchronous>, transform_indices = @transform_4, window_bounds = array<i64: 1, 96>}, {transform_indices = @transform_5, window_bounds = array<i64: 512, 96>}]} {
    %c0_i32 = arith.constant 0 : i32
    %0 = arith.cmpi eq, %arg1, %c0_i32 : i32
    %1 = arith.extui %0 : i1 to i32
    %c0_i32_0 = arith.constant 0 : i32
    %2 = arith.cmpi ne, %1, %c0_i32_0 : i32
    scf.if %2 {
      %cst_10 = arith.constant 0.000000e+00 : f32
      %12 = vector.broadcast %cst_10 : f32 to vector<512x96xf32>
      %c0_11 = arith.constant 0 : index
      %c0_12 = arith.constant 0 : index
      %13 = vector.load %arg8[%c0_11, %c0_12] : memref<512x96xf32, #tpu.memory_space<vmem>>, vector<512x96xf32>
      tpu.vector_store %arg8[%c0_11, %c0_12], %12 {strides = array<i32>} : memref<512x96xf32, #tpu.memory_space<vmem>>, vector<512x96xf32>,
    } else {
    }
    %c0 = arith.constant 0 : index
    %c0_1 = arith.constant 0 : index
    %3 = vector.load %arg8[%c0, %c0_1] : memref<512x96xf32, #tpu.memory_space<vmem>>, vector<512x96xf32>
    %c0_2 = arith.constant 0 : index
    %c0_3 = arith.constant 0 : index
    %4 = vector.load %arg2[%c0_2, %c0_3] : memref<512x64xbf16, #tpu.memory_space<vmem>>, vector<512x64xbf16>
    %c0_4 = arith.constant 0 : index
    %c0_5 = arith.constant 0 : index
    %5 = vector.load %arg3[%c0_4, %c0_5] : memref<64x96xbf16, #tpu.memory_space<vmem>>, vector<64x96xbf16>
    %cst = arith.constant dense<0.000000e+00> : vector<512x96xf32>
    %6 = tpu.matmul %4, %5, %cst {dimension_numbers = #tpu.dot_dimension_numbers<[1], [0], [0], [1], [0, 0, 1, 1], [], []>} : vector<512x64xbf16>, vector<64x96xbf16>, vector<512x96xf32> -> vector<512x96xf32>
    %7 = arith.addf %3, %6 : vector<512x96xf32>
    %c0_6 = arith.constant 0 : index
    %c0_7 = arith.constant 0 : index
    %8 = vector.load %arg8[%c0_6, %c0_7] : memref<512x96xf32, #tpu.memory_space<vmem>>, vector<512x96xf32>
    tpu.vector_store %arg8[%c0_6, %c0_7], %7 {strides = array<i32>} : memref<512x96xf32, #tpu.memory_space<vmem>>, vector<512x96xf32>,
    %c0_i32_8 = arith.constant 0 : i32
    %9 = arith.cmpi eq, %arg1, %c0_i32_8 : i32
    %10 = arith.extui %9 : i1 to i32
    %c0_i32_9 = arith.constant 0 : i32
    %11 = arith.cmpi ne, %10, %c0_i32_9 : i32
    scf.if %11 {
      %c0_10 = arith.constant 0 : index
      %c0_11 = arith.constant 0 : index
      %12 = vector.load %arg8[%c0_10, %c0_11] : memref<512x96xf32, #tpu.memory_space<vmem>>, vector<512x96xf32>
      %c0_12 = arith.constant 0 : index
      %c0_13 = arith.constant 0 : index
      %13 = vector.load %arg4[%c0_12, %c0_13] : memref<1x96xf32, #tpu.memory_space<vmem>>, vector<1x96xf32>
      %14 = vector.broadcast %13 : vector<1x96xf32> to vector<512x96xf32>
      %15 = arith.addf %12, %14 : vector<512x96xf32>
      %cst_14 = arith.constant dense<0.000000e+00> : vector<512xf32>
      %16 = vector.multi_reduction <add>, %15, %cst_14 [1] : vector<512x96xf32> to vector<512xf32>
      %17 = vector.shape_cast %16 : vector<512xf32> to vector<512x1xf32>
      %cst_15 = arith.constant 9.600000e+01 : f32
      %18 = vector.broadcast %cst_15 : f32 to vector<512x1xf32>
      %19 = arith.divf %17, %18 : vector<512x1xf32>
      %20 = vector.broadcast %19 : vector<512x1xf32> to vector<512x96xf32>
      %21 = arith.subf %15, %20 : vector<512x96xf32>
      %22 = arith.mulf %21, %21 : vector<512x96xf32>
      %cst_16 = arith.constant dense<0.000000e+00> : vector<512xf32>
      %23 = vector.multi_reduction <add>, %22, %cst_16 [1] : vector<512x96xf32> to vector<512xf32>
      %24 = vector.shape_cast %23 : vector<512xf32> to vector<512x1xf32>
      %cst_17 = arith.constant 9.600000e+01 : f32
      %25 = vector.broadcast %cst_17 : f32 to vector<512x1xf32>
      %26 = arith.divf %24, %25 : vector<512x1xf32>
      %cst_18 = arith.constant 9.99999974E-6 : f32
      %27 = vector.broadcast %cst_18 : f32 to vector<512x1xf32>
      %28 = arith.addf %26, %27 : vector<512x1xf32>
      %29 = math.rsqrt %28 : vector<512x1xf32>
      %30 = vector.broadcast %29 : vector<512x1xf32> to vector<512x96xf32>
      %31 = arith.mulf %21, %30 : vector<512x96xf32>
      %c0_19 = arith.constant 0 : index
      %c0_20 = arith.constant 0 : index
      %32 = vector.load %arg5[%c0_19, %c0_20] : memref<1x96xf32, #tpu.memory_space<vmem>>, vector<1x96xf32>
      %33 = vector.broadcast %32 : vector<1x96xf32> to vector<512x96xf32>
      %34 = arith.mulf %31, %33 : vector<512x96xf32>
      %c0_21 = arith.constant 0 : index
      %c0_22 = arith.constant 0 : index
      %35 = vector.load %arg6[%c0_21, %c0_22] : memref<1x96xf32, #tpu.memory_space<vmem>>, vector<1x96xf32>
      %36 = vector.broadcast %35 : vector<1x96xf32> to vector<512x96xf32>
      %37 = arith.addf %34, %36 : vector<512x96xf32>
      %c0_23 = arith.constant 0 : index
      %c0_24 = arith.constant 0 : index
      %38 = vector.load %arg7[%c0_23, %c0_24] : memref<512x96xf32, #tpu.memory_space<vmem>>, vector<512x96xf32>
      tpu.vector_store %arg7[%c0_23, %c0_24], %37 {strides = array<i32>} : memref<512x96xf32, #tpu.memory_space<vmem>>, vector<512x96xf32>,
    } else {
    }
    return
  }
  func.func @transform_0(%arg0: i32, %arg1: i32) -> (i32, i32) {
    %c0_i32 = arith.constant 0 : i32
    return %arg0, %arg1 : i32, i32
  }
  func.func @transform_1(%arg0: i32, %arg1: i32) -> (i32, i32) {
    %c0_i32 = arith.constant 0 : i32
    %c0_i32_0 = arith.constant 0 : i32
    return %arg1, %c0_i32 : i32, i32
  }
  func.func @transform_2(%arg0: i32, %arg1: i32) -> (i32, i32) {
    %c0_i32 = arith.constant 0 : i32
    %c0_i32_0 = arith.constant 0 : i32
    %c0_i32_1 = arith.constant 0 : i32
    return %c0_i32, %c0_i32_0 : i32, i32
  }
  func.func @transform_3(%arg0: i32, %arg1: i32) -> (i32, i32) {
    %c0_i32 = arith.constant 0 : i32
    %c0_i32_0 = arith.constant 0 : i32
    %c0_i32_1 = arith.constant 0 : i32
    return %c0_i32, %c0_i32_0 : i32, i32
  }
  func.func @transform_4(%arg0: i32, %arg1: i32) -> (i32, i32) {
    %c0_i32 = arith.constant 0 : i32
    %c0_i32_0 = arith.constant 0 : i32
    %c0_i32_1 = arith.constant 0 : i32
    return %c0_i32, %c0_i32_0 : i32, i32
  }
  func.func @transform_5(%arg0: i32, %arg1: i32) -> (i32, i32) {
    %c0_i32 = arith.constant 0 : i32
    %c0_i32_0 = arith.constant 0 : i32
    return %arg0, %c0_i32 : i32, i32
  }
}

</mosaic_0001>

<llo_original>
// kernel: patch_embed_forward.1
$region0: #{patch_embed_forward.1}
  #allocation0 [shape = 'u32[]', space=smem, size = 0x4, offset = 0x4, fixed_abs, tag = 'smem constant byte address 0x4 - core index']
  #allocation1 [shape = 'u32[144,128]{1,0:T(1,128)}', space=vmem, size = 0x12000, scoped, tag = 'internal scratch']
  #allocation2 [shape = 'f32[512,96]{1,0:T(8,128)}', space=vmem, size = 0x40000, scoped, tag = 'scratch operand']
  %s0 = inlined_call_operand.vmem [shape: bf16[1024,64], index: 0, kind: input, shape index: {}]
  %s1 = inlined_call_operand.vmem [shape: bf16[64,96], index: 1, kind: input, shape index: {}]
  %s2 = inlined_call_operand.vmem [shape: f32[1,96], index: 2, kind: input, shape index: {}]
  %s3 = inlined_call_operand.vmem [shape: f32[1,96], index: 3, kind: input, shape index: {}]
  %s4 = inlined_call_operand.vmem [shape: f32[1,96], index: 4, kind: input, shape index: {}]
  %s5 = inlined_call_operand.hbm [shape: f32[1024,96], index: 5, kind: output, shape index: {}]
  %s6 = sld [smem:[#allocation0]]
  $region61: #{patch_embed_forward.1} parent=0
    _
  %s8 = ssub.s32 1, %s6
  %s9 = scalar_select 0, %s8, %s6
  $region1: #{patch_embed_forward.1} parent=0
    #allocation3 [shape = 'u8[524288]{0}', space=vmem, size = 0x80000, scoped, tag = 'output window, operand 0']
    #allocation4 [shape = 's32[2]{0}', space=sflag, size = 0x8, scoped, tag = 'scoped memory for patch_embed_forward.1']
    %10 = vsyncpa [#allocation4], 0
    %s11 = scalar_lea.sflag [#allocation4], 1
    %12 = vsyncpa %s11, 0
    loop: start=0, step=1, limit=4
    $region2: #{patch_embed_forward.1} parent=1 // loop_pre_header
      _
    $region3: #{patch_embed_forward.1} parent=1 // loop_header
      %s14 = sphi 0, %s18
      %p15 = scmp.ge.s32.totalorder %s14, 4
      %s21 = sphi 0, %s33
      %s22 = sphi 0, %s29
      %s23 = sphi 0, %s21
      %s24 = sphi 0, %s22
      %s25 = sphi 0, %s23
      %s26 = sphi 0, %s24
      %s38 = sphi 0, %s40
      %s41 = sphi 0, %s38
      %s42 = sphi 0, %s41
      %s58 = sphi 0, %s42
      %s64 = sphi 0, %s66
      %s67 = sphi 0, %s64
      %s68 = sphi 0, %s67
      %s84 = sphi 0, %s68
      %s88 = sphi 0, %s88
      %s90 = sphi 0, %s88
      %s91 = sphi 0, %s90
      %s105 = sphi 0, %s91
      %s109 = sphi 0, %s109
      %s111 = sphi 0, %s109
      %s112 = sphi 0, %s111
      %s126 = sphi 0, %s112
      %s130 = sphi 0, %s130
      %s132 = sphi 0, %s130
      %s133 = sphi 0, %s132
      %s147 = sphi 0, %s133
      %s153 = sphi 0, %s155
      %s156 = sphi 0, %s153
      %s157 = sphi 0, %s156
      %s173 = sphi 0, %s157
    $region4: #{patch_embed_forward.1} parent=1 // loop_header_branch
      %17 = sbr.rel (%p15) target = $region8
    $region5: #{patch_embed_forward.1} parent=1 // loop_body
      %s19 = ssub.s32 %s14, 1
      %s20 = ssub.s32 %s14, 2
      %s27 = sadd.s32 1, %s22
      %p28 = scmp.ge.s32.totalorder %s27, 1
      %s29 = scalar_select %p28, 0, %s27
      %s30 = sadd.s32 1, %s21
      %s31 = scalar_select %p28, %s30, %s21
      %p32 = scmp.ge.s32.totalorder %s31, 2
      %s33 = scalar_select %p32, 0, %s31
      %s34 = ssub.s32 %s21, %s33
      %s35 = ssub.s32 %s22, %s29
      %s36 = sor.u32 %s34, %s35
      %p37 = scmp.eq.s32.totalorder %s36, 0
      %s39 = sadd.s32 %s38, 1
      %s40 = scalar_select %p37, %s38, %s39
      %p43 = pneg %p37
      %p44 = scmp.eq.s32.totalorder %s14, 1
      %p45 = por %p43, %p44
      %p46 = scmp.ne.s32.totalorder %s38, %s41
      %p47 = scmp.eq.s32.totalorder %s14, 0
      %p48 = por %p46, %p47
      %p49 = scmp.ne.s32.totalorder %s38, %s41
      %p50 = scmp.eq.s32.totalorder %s19, 1
      %p51 = por %p49, %p50
      %p52 = scmp.ne.s32.totalorder %s41, %s42
      %p53 = scmp.eq.s32.totalorder %s19, 0
      %p54 = por %p52, %p53
      %p55 = scmp.ne.s32.totalorder %s41, %s42
      %p56 = scmp.eq.s32.totalorder %s20, 1
      %p57 = por %p55, %p56
      %p59 = scmp.ne.s32.totalorder %s42, %s58
      %p60 = scmp.eq.s32.totalorder %s20, 0
      %p61 = por %p59, %p60
      %s62 = ssub.s32 %s22, %s29
      %p63 = scmp.eq.s32.totalorder %s62, 0
      %s65 = sadd.s32 %s64, 1
      %s66 = scalar_select %p63, %s64, %s65
      %p69 = pneg %p63
      %p70 = scmp.eq.s32.totalorder %s14, 1
      %p71 = por %p69, %p70
      %p72 = scmp.ne.s32.totalorder %s64, %s67
      %p73 = scmp.eq.s32.totalorder %s14, 0
      %p74 = por %p72, %p73
      %p75 = scmp.ne.s32.totalorder %s64, %s67
      %p76 = scmp.eq.s32.totalorder %s19, 1
      %p77 = por %p75, %p76
      %p78 = scmp.ne.s32.totalorder %s67, %s68
      %p79 = scmp.eq.s32.totalorder %s19, 0
      %p80 = por %p78, %p79
      %p81 = scmp.ne.s32.totalorder %s67, %s68
      %p82 = scmp.eq.s32.totalorder %s20, 1
      %p83 = por %p81, %p82
      %p85 = scmp.ne.s32.totalorder %s68, %s84
      %p86 = scmp.eq.s32.totalorder %s20, 0
      %p87 = por %p85, %p86
      %s89 = sadd.s32 %s88, 1
      %p92 = scmp.eq.s32.totalorder %s14, 1
      %p93 = scmp.ne.s32.totalorder %s88, %s90
      %p94 = scmp.eq.s32.totalorder %s14, 0
      %p95 = por %p93, %p94
      %p96 = scmp.ne.s32.totalorder %s88, %s90
      %p97 = scmp.eq.s32.totalorder %s19, 1
      %p98 = por %p96, %p97
      %p99 = scmp.ne.s32.totalorder %s90, %s91
      %p100 = scmp.eq.s32.totalorder %s19, 0
      %p101 = por %p99, %p100
      %p102 = scmp.ne.s32.totalorder %s90, %s91
      %p103 = scmp.eq.s32.totalorder %s20, 1
      %p104 = por %p102, %p103
      %p106 = scmp.ne.s32.totalorder %s91, %s105
      %p107 = scmp.eq.s32.totalorder %s20, 0
      %p108 = por %p106, %p107
      %s110 = sadd.s32 %s109, 1
      %p113 = scmp.eq.s32.totalorder %s14, 1
      %p114 = scmp.ne.s32.totalorder %s109, %s111
      %p115 = scmp.eq.s32.totalorder %s14, 0
      %p116 = por %p114, %p115
      %p117 = scmp.ne.s32.totalorder %s109, %s111
      %p118 = scmp.eq.s32.totalorder %s19, 1
      %p119 = por %p117, %p118
      %p120 = scmp.ne.s32.totalorder %s111, %s112
      %p121 = scmp.eq.s32.totalorder %s19, 0
      %p122 = por %p120, %p121
      %p123 = scmp.ne.s32.totalorder %s111, %s112
      %p124 = scmp.eq.s32.totalorder %s20, 1
      %p125 = por %p123, %p124
      %p127 = scmp.ne.s32.totalorder %s112, %s126
      %p128 = scmp.eq.s32.totalorder %s20, 0
      %p129 = por %p127, %p128
      %s131 = sadd.s32 %s130, 1
      %p134 = scmp.eq.s32.totalorder %s14, 1
      %p135 = scmp.ne.s32.totalorder %s130, %s132
      %p136 = scmp.eq.s32.totalorder %s14, 0
      %p137 = por %p135, %p136
      %p138 = scmp.ne.s32.totalorder %s130, %s132
      %p139 = scmp.eq.s32.totalorder %s19, 1
      %p140 = por %p138, %p139
      %p141 = scmp.ne.s32.totalorder %s132, %s133
      %p142 = scmp.eq.s32.totalorder %s19, 0
      %p143 = por %p141, %p142
      %p144 = scmp.ne.s32.totalorder %s132, %s133
      %p145 = scmp.eq.s32.totalorder %s20, 1
      %p146 = por %p144, %p145
      %p148 = scmp.ne.s32.totalorder %s133, %s147
      %p149 = scmp.eq.s32.totalorder %s20, 0
      %p150 = por %p148, %p149
      %s151 = ssub.s32 %s21, %s33
      %p152 = scmp.eq.s32.totalorder %s151, 0
      %s154 = sadd.s32 %s153, 1
      %s155 = scalar_select %p152, %s153, %s154
      %p158 = pneg %p152
      %p159 = scmp.eq.s32.totalorder %s14, 1
      %p160 = por %p158, %p159
      %p161 = scmp.ne.s32.totalorder %s153, %s156
      %p162 = scmp.eq.s32.totalorder %s14, 0
      %p163 = por %p161, %p162
      %p164 = scmp.ne.s32.totalorder %s153, %s156
      %p165 = scmp.eq.s32.totalorder %s19, 1
      %p166 = por %p164, %p165
      %p167 = scmp.ne.s32.totalorder %s156, %s157
      %p168 = scmp.eq.s32.totalorder %s19, 0
      %p169 = por %p167, %p168
      %p170 = scmp.ne.s32.totalorder %s156, %s157
      %p171 = scmp.eq.s32.totalorder %s20, 1
      %p172 = por %p170, %p171
      %p174 = scmp.ne.s32.totalorder %s157, %s173
      %p175 = scmp.eq.s32.totalorder %s20, 0
      %p176 = por %p174, %p175
      %p177 = scmp.le.s32.totalorder 1, %s14
      %p178 = scmp.lt.s32.totalorder %s14, 3
      %p179 = pnand %p177, %p178
      %p180 = pneg %p179
      // Predicated region
      $region9: #{patch_embed_forward.1} parent=5 // pred_check
        _
      $region10: #{patch_embed_forward.1} parent=5 // pred_check_branch
        %182 = sbr.rel (%p179) target = $region12
      $region11: #{patch_embed_forward.1} parent=5 // pred_region
        %s183 = ssub.s32 %s14, 1
        // Predicated region
        $region13: #{patch_embed_forward.1} parent=11 // pred_check
          %p184 = pneg %p80
        $region14: #{patch_embed_forward.1} parent=11 // pred_check_branch
          %186 = sbr.rel (%p184) target = $region16
        $region15: #{patch_embed_forward.1} parent=11 // pred_region
          %s187 = smul.u32 8, %s24
          %p188 = scmp.lt.s32.totalorder %s187, 7
          %s189 = scalar_select %p188, %s187, 7
          %s190 = smul.addr %s189, 4
          %s191 = scalar_lea.vmem %s1, %s190
          %s192 = smul.u32 8, %s24
        $region16: #{patch_embed_forward.1} parent=11 // pred_fallthru
          _
        // Predicated region
        $region17: #{patch_embed_forward.1} parent=11 // pred_check
          %p193 = pneg %p101
        $region18: #{patch_embed_forward.1} parent=11 // pred_check_branch
          %195 = sbr.rel (%p193) target = $region20
        $region19: #{patch_embed_forward.1} parent=11 // pred_region
          _
        $region20: #{patch_embed_forward.1} parent=11 // pred_fallthru
          _
        // Predicated region
        $region21: #{patch_embed_forward.1} parent=11 // pred_check
          %p196 = pneg %p122
        $region22: #{patch_embed_forward.1} parent=11 // pred_check_branch
          %198 = sbr.rel (%p196) target = $region24
        $region23: #{patch_embed_forward.1} parent=11 // pred_region
          _
        $region24: #{patch_embed_forward.1} parent=11 // pred_fallthru
          _
        // Predicated region
        $region25: #{patch_embed_forward.1} parent=11 // pred_check
          %p199 = pneg %p143
        $region26: #{patch_embed_forward.1} parent=11 // pred_check_branch
          %201 = sbr.rel (%p199) target = $region28
        $region27: #{patch_embed_forward.1} parent=11 // pred_region
          _
        $region28: #{patch_embed_forward.1} parent=11 // pred_fallthru
          _
      $region12: #{patch_embed_forward.1} parent=5 // pred_fallthru
        _
      %p202 = scmp.lt.s32.totalorder %s14, 2
      // Predicated region
      $region29: #{patch_embed_forward.1} parent=5 // pred_check
        %p203 = pneg %p202
      $region30: #{patch_embed_forward.1} parent=5 // pred_check_branch
        %205 = sbr.rel (%p203) target = $region32
      $region31: #{patch_embed_forward.1} parent=5 // pred_region
        // Predicated region
        $region33: #{patch_embed_forward.1} parent=31 // pred_check
          %p206 = pneg %p48
        $region34: #{patch_embed_forward.1} parent=31 // pred_check_branch
          %208 = sbr.rel (%p206) target = $region36
        $region35: #{patch_embed_forward.1} parent=31 // pred_region
          %s209 = smul.u32 64, %s21
          %p210 = scmp.lt.s32.totalorder %s209, 127
          %s211 = scalar_select %p210, %s209, 127
          %p212 = scmp.lt.s32.totalorder %s22, 0
          %s213 = scalar_select %p212, %s22, 0
          %s214 = sadd.s32 %s213, %s211
          %s215 = smul.addr %s214, 4
          %s216 = scalar_lea.vmem %s0, %s215
          %s217 = smul.u32 64, %s21
        $region36: #{patch_embed_forward.1} parent=31 // pred_fallthru
          _
      $region32: #{patch_embed_forward.1} parent=5 // pred_fallthru
        _
      %p218 = scmp.le.s32.totalorder 1, %s14
      %p219 = scmp.lt.s32.totalorder %s14, 3
      %p220 = pnand %p218, %p219
      %p221 = pneg %p220
      // Predicated region
      $region37: #{patch_embed_forward.1} parent=5 // pred_check
        _
      $region38: #{patch_embed_forward.1} parent=5 // pred_check_branch
        %223 = sbr.rel (%p220) target = $region40
      $region39: #{patch_embed_forward.1} parent=5 // pred_region
        %s224 = ssub.s32 %s14, 1
        %s225 = smul.u32 64, %s23
        %p226 = scmp.lt.s32.totalorder %s225, 127
        %s227 = scalar_select %p226, %s225, 127
        %p228 = scmp.lt.s32.totalorder %s24, 0
        %s229 = scalar_select %p228, %s24, 0
        %s230 = sadd.s32 %s229, %s227
        %s231 = smul.addr %s230, 4
        %s232 = scalar_lea.vmem %s0, %s231
        %p233 = pneg %p54
        %p234 = pneg %p51
        %s235 = smul.u32 8, %s24
        %p236 = scmp.lt.s32.totalorder %s235, 7
        %s237 = scalar_select %p236, %s235, 7
        %s238 = smul.addr %s237, 4
        %s239 = scalar_lea.vmem %s1, %s238
        %p240 = pneg %p80
        %p241 = pneg %p77
        %p242 = pneg %p101
        %p243 = pneg %p98
        %p244 = pneg %p122
        %p245 = pneg %p119
        %p246 = pneg %p143
        %p247 = pneg %p140
        %p248 = pneg %p169
        %p249 = pneg %p166
        %s250 = sand.u32 %s156, 1
        %s251 = scalar_lea.sflag [#allocation4], %s250
        %s252 = sand.u32 %s156, 1
        %s253 = smul.addr %s252, 512
        %s254 = scalar_lea.vmem [#allocation3], %s253
        %s255 = smul.u32 64, %s23
        %p256 = scmp.lt.s32.totalorder %s255, 127
        %s257 = scalar_select %p256, %s255, 127
        %p258 = scmp.lt.s32.totalorder %s24, 0
        %s259 = scalar_select %p258, %s24, 0
        %s260 = sadd.s32 %s259, %s257
        %s261 = smul.addr %s260, 4
        %s262 = scalar_lea.vmem %s0, %s261
        %s263 = smul.u32 64, %s23
        %s264 = smul.u32 8, %s24
        %p265 = scmp.lt.s32.totalorder %s264, 7
        %s266 = scalar_select %p265, %s264, 7
        %s267 = smul.addr %s266, 4
        %s268 = scalar_lea.vmem %s1, %s267
        %s269 = smul.u32 8, %s24
        %s270 = smul.u32 64, %s23
        %p272 = scmp.eq.s32.totalorder %s24, 0
        // Predicated region
        $region41: #{patch_embed_forward.1} parent=39 // pred_check
          %p273 = pneg %p272
        $region42: #{patch_embed_forward.1} parent=39 // pred_check_branch
          %275 = sbr.rel (%p273) target = $region44
        $region43: #{patch_embed_forward.1} parent=39 // pred_region
          %vm276 = vcmask 785408
          %277 = vst.msk [vmem:[#allocation2] sm:$0xff] %vm276, 0.0
          %278 = vst.msk [vmem:[#allocation2 + $0x8] sm:$0xff] %vm276, 0.0
          %279 = vst.msk [vmem:[#allocation2 + $0x10] sm:$0xff] %vm276, 0.0
          %280 = vst.msk [vmem:[#allocation2 + $0x18] sm:$0xff] %vm276, 0.0
          %281 = vst.msk [vmem:[#allocation2 + $0x20] sm:$0xff] %vm276, 0.0
          %282 = vst.msk [vmem:[#allocation2 + $0x28] sm:$0xff] %vm276, 0.0
          %283 = vst.msk [vmem:[#allocation2 + $0x30] sm:$0xff] %vm276, 0.0
          %284 = vst.msk [vmem:[#allocation2 + $0x38] sm:$0xff] %vm276, 0.0
          %285 = vst.msk [vmem:[#allocation2 + $0x40] sm:$0xff] %vm276, 0.0
          %286 = vst.msk [vmem:[#allocation2 + $0x48] sm:$0xff] %vm276, 0.0
          %287 = vst.msk [vmem:[#allocation2 + $0x50] sm:$0xff] %vm276, 0.0
          %288 = vst.msk [vmem:[#allocation2 + $0x58] sm:$0xff] %vm276, 0.0
          %289 = vst.msk [vmem:[#allocation2 + $0x60] sm:$0xff] %vm276, 0.0
          %290 = vst.msk [vmem:[#allocation2 + $0x68] sm:$0xff] %vm276, 0.0
          %291 = vst.msk [vmem:[#allocation2 + $0x70] sm:$0xff] %vm276, 0.0
          %292 = vst.msk [vmem:[#allocation2 + $0x78] sm:$0xff] %vm276, 0.0
          %293 = vst.msk [vmem:[#allocation2 + $0x80] sm:$0xff] %vm276, 0.0
          %294 = vst.msk [vmem:[#allocation2 + $0x88] sm:$0xff] %vm276, 0.0
          %295 = vst.msk [vmem:[#allocation2 + $0x90] sm:$0xff] %vm276, 0.0
          %296 = vst.msk [vmem:[#allocation2 + $0x98] sm:$0xff] %vm276, 0.0
          %297 = vst.msk [vmem:[#allocation2 + $0xa0] sm:$0xff] %vm276, 0.0
          %298 = vst.msk [vmem:[#allocation2 + $0xa8] sm:$0xff] %vm276, 0.0
          %299 = vst.msk [vmem:[#allocation2 + $0xb0] sm:$0xff] %vm276, 0.0
          %300 = vst.msk [vmem:[#allocation2 + $0xb8] sm:$0xff] %vm276, 0.0
          %301 = vst.msk [vmem:[#allocation2 + $0xc0] sm:$0xff] %vm276, 0.0
          %302 = vst.msk [vmem:[#allocation2 + $0xc8] sm:$0xff] %vm276, 0.0
          %303 = vst.msk [vmem:[#allocation2 + $0xd0] sm:$0xff] %vm276, 0.0
          %304 = vst.msk [vmem:[#allocation2 + $0xd8] sm:$0xff] %vm276, 0.0
          %305 = vst.msk [vmem:[#allocation2 + $0xe0] sm:$0xff] %vm276, 0.0
          %306 = vst.msk [vmem:[#allocation2 + $0xe8] sm:$0xff] %vm276, 0.0
          %307 = vst.msk [vmem:[#allocation2 + $0xf0] sm:$0xff] %vm276, 0.0
          %308 = vst.msk [vmem:[#allocation2 + $0xf8] sm:$0xff] %vm276, 0.0
          %309 = vst.msk [vmem:[#allocation2 + $0x100] sm:$0xff] %vm276, 0.0
          %310 = vst.msk [vmem:[#allocation2 + $0x108] sm:$0xff] %vm276, 0.0
          %311 = vst.msk [vmem:[#allocation2 + $0x110] sm:$0xff] %vm276, 0.0
          %312 = vst.msk [vmem:[#allocation2 + $0x118] sm:$0xff] %vm276, 0.0
          %313 = vst.msk [vmem:[#allocation2 + $0x120] sm:$0xff] %vm276, 0.0
          %314 = vst.msk [vmem:[#allocation2 + $0x128] sm:$0xff] %vm276, 0.0
          %315 = vst.msk [vmem:[#allocation2 + $0x130] sm:$0xff] %vm276, 0.0
          %316 = vst.msk [vmem:[#allocation2 + $0x138] sm:$0xff] %vm276, 0.0
          %317 = vst.msk [vmem:[#allocation2 + $0x140] sm:$0xff] %vm276, 0.0
          %318 = vst.msk [vmem:[#allocation2 + $0x148] sm:$0xff] %vm276, 0.0
          %319 = vst.msk [vmem:[#allocation2 + $0x150] sm:$0xff] %vm276, 0.0
          %320 = vst.msk [vmem:[#allocation2 + $0x158] sm:$0xff] %vm276, 0.0
          %321 = vst.msk [vmem:[#allocation2 + $0x160] sm:$0xff] %vm276, 0.0
          %322 = vst.msk [vmem:[#allocation2 + $0x168] sm:$0xff] %vm276, 0.0
          %323 = vst.msk [vmem:[#allocation2 + $0x170] sm:$0xff] %vm276, 0.0
          %324 = vst.msk [vmem:[#allocation2 + $0x178] sm:$0xff] %vm276, 0.0
          %325 = vst.msk [vmem:[#allocation2 + $0x180] sm:$0xff] %vm276, 0.0
          %326 = vst.msk [vmem:[#allocation2 + $0x188] sm:$0xff] %vm276, 0.0
          %327 = vst.msk [vmem:[#allocation2 + $0x190] sm:$0xff] %vm276, 0.0
          %328 = vst.msk [vmem:[#allocation2 + $0x198] sm:$0xff] %vm276, 0.0
          %329 = vst.msk [vmem:[#allocation2 + $0x1a0] sm:$0xff] %vm276, 0.0
          %330 = vst.msk [vmem:[#allocation2 + $0x1a8] sm:$0xff] %vm276, 0.0
          %331 = vst.msk [vmem:[#allocation2 + $0x1b0] sm:$0xff] %vm276, 0.0
          %332 = vst.msk [vmem:[#allocation2 + $0x1b8] sm:$0xff] %vm276, 0.0
          %333 = vst.msk [vmem:[#allocation2 + $0x1c0] sm:$0xff] %vm276, 0.0
          %334 = vst.msk [vmem:[#allocation2 + $0x1c8] sm:$0xff] %vm276, 0.0
          %335 = vst.msk [vmem:[#allocation2 + $0x1d0] sm:$0xff] %vm276, 0.0
          %336 = vst.msk [vmem:[#allocation2 + $0x1d8] sm:$0xff] %vm276, 0.0
          %337 = vst.msk [vmem:[#allocation2 + $0x1e0] sm:$0xff] %vm276, 0.0
          %338 = vst.msk [vmem:[#allocation2 + $0x1e8] sm:$0xff] %vm276, 0.0
          %339 = vst.msk [vmem:[#allocation2 + $0x1f0] sm:$0xff] %vm276, 0.0
          %340 = vst.msk [vmem:[#allocation2 + $0x1f8] sm:$0xff] %vm276, 0.0
        $region44: #{patch_embed_forward.1} parent=39 // pred_fallthru
          _
        %v341 = vld [vmem:[#allocation2] sm:$0xff]
        %v342 = vld [vmem:[#allocation2 + $0x8] sm:$0xff]
        %v343 = vld [vmem:[#allocation2 + $0x10] sm:$0xff]
        %v344 = vld [vmem:[#allocation2 + $0x18] sm:$0xff]
        %v345 = vld [vmem:[#allocation2 + $0x20] sm:$0xff]
        %v346 = vld [vmem:[#allocation2 + $0x28] sm:$0xff]
        %v347 = vld [vmem:[#allocation2 + $0x30] sm:$0xff]
        %v348 = vld [vmem:[#allocation2 + $0x38] sm:$0xff]
        %v349 = vld [vmem:[#allocation2 + $0x40] sm:$0xff]
        %v350 = vld [vmem:[#allocation2 + $0x48] sm:$0xff]
        %v351 = vld [vmem:[#allocation2 + $0x50] sm:$0xff]
        %v352 = vld [vmem:[#allocation2 + $0x58] sm:$0xff]
        %v353 = vld [vmem:[#allocation2 + $0x60] sm:$0xff]
        %v354 = vld [vmem:[#allocation2 + $0x68] sm:$0xff]
        %v355 = vld [vmem:[#allocation2 + $0x70] sm:$0xff]
        %v356 = vld [vmem:[#allocation2 + $0x78] sm:$0xff]
        %v357 = vld [vmem:[#allocation2 + $0x80] sm:$0xff]
        %v358 = vld [vmem:[#allocation2 + $0x88] sm:$0xff]
        %v359 = vld [vmem:[#allocation2 + $0x90] sm:$0xff]
        %v360 = vld [vmem:[#allocation2 + $0x98] sm:$0xff]
        %v361 = vld [vmem:[#allocation2 + $0xa0] sm:$0xff]
        %v362 = vld [vmem:[#allocation2 + $0xa8] sm:$0xff]
        %v363 = vld [vmem:[#allocation2 + $0xb0] sm:$0xff]
        %v364 = vld [vmem:[#allocation2 + $0xb8] sm:$0xff]
        %v365 = vld [vmem:[#allocation2 + $0xc0] sm:$0xff]
        %v366 = vld [vmem:[#allocation2 + $0xc8] sm:$0xff]
        %v367 = vld [vmem:[#allocation2 + $0xd0] sm:$0xff]
        %v368 = vld [vmem:[#allocation2 + $0xd8] sm:$0xff]
        %v369 = vld [vmem:[#allocation2 + $0xe0] sm:$0xff]
        %v370 = vld [vmem:[#allocation2 + $0xe8] sm:$0xff]
        %v371 = vld [vmem:[#allocation2 + $0xf0] sm:$0xff]
        %v372 = vld [vmem:[#allocation2 + $0xf8] sm:$0xff]
        %v373 = vld [vmem:[#allocation2 + $0x100] sm:$0xff]
        %v374 = vld [vmem:[#allocation2 + $0x108] sm:$0xff]
        %v375 = vld [vmem:[#allocation2 + $0x110] sm:$0xff]
        %v376 = vld [vmem:[#allocation2 + $0x118] sm:$0xff]
        %v377 = vld [vmem:[#allocation2 + $0x120] sm:$0xff]
        %v378 = vld [vmem:[#allocation2 + $0x128] sm:$0xff]
        %v379 = vld [vmem:[#allocation2 + $0x130] sm:$0xff]
        %v380 = vld [vmem:[#allocation2 + $0x138] sm:$0xff]
        %v381 = vld [vmem:[#allocation2 + $0x140] sm:$0xff]
        %v382 = vld [vmem:[#allocation2 + $0x148] sm:$0xff]
        %v383 = vld [vmem:[#allocation2 + $0x150] sm:$0xff]
        %v384 = vld [vmem:[#allocation2 + $0x158] sm:$0xff]
        %v385 = vld [vmem:[#allocation2 + $0x160] sm:$0xff]
        %v386 = vld [vmem:[#allocation2 + $0x168] sm:$0xff]
        %v387 = vld [vmem:[#allocation2 + $0x170] sm:$0xff]
        %v388 = vld [vmem:[#allocation2 + $0x178] sm:$0xff]
        %v389 = vld [vmem:[#allocation2 + $0x180] sm:$0xff]
        %v390 = vld [vmem:[#allocation2 + $0x188] sm:$0xff]
        %v391 = vld [vmem:[#allocation2 + $0x190] sm:$0xff]
        %v392 = vld [vmem:[#allocation2 + $0x198] sm:$0xff]
        %v393 = vld [vmem:[#allocation2 + $0x1a0] sm:$0xff]
        %v394 = vld [vmem:[#allocation2 + $0x1a8] sm:$0xff]
        %v395 = vld [vmem:[#allocation2 + $0x1b0] sm:$0xff]
        %v396 = vld [vmem:[#allocation2 + $0x1b8] sm:$0xff]
        %v397 = vld [vmem:[#allocation2 + $0x1c0] sm:$0xff]
        %v398 = vld [vmem:[#allocation2 + $0x1c8] sm:$0xff]
        %v399 = vld [vmem:[#allocation2 + $0x1d0] sm:$0xff]
        %v400 = vld [vmem:[#allocation2 + $0x1d8] sm:$0xff]
        %v401 = vld [vmem:[#allocation2 + $0x1e0] sm:$0xff]
        %v402 = vld [vmem:[#allocation2 + $0x1e8] sm:$0xff]
        %v403 = vld [vmem:[#allocation2 + $0x1f0] sm:$0xff]
        %v404 = vld [vmem:[#allocation2 + $0x1f8] sm:$0xff]
        %v405 = vld [vmem:[%s262] sm:$0xf]
        %v406 = vld [vmem:[%s262 + $0x4] sm:$0xf]
        %v407 = vld [vmem:[%s262 + $0x8] sm:$0xf]
        %v408 = vld [vmem:[%s262 + $0xc] sm:$0xf]
        %v409 = vld [vmem:[%s262 + $0x10] sm:$0xf]
        %v410 = vld [vmem:[%s262 + $0x14] sm:$0xf]
        %v411 = vld [vmem:[%s262 + $0x18] sm:$0xf]
        %v412 = vld [vmem:[%s262 + $0x1c] sm:$0xf]
        %v413 = vld [vmem:[%s262 + $0x20] sm:$0xf]
        %v414 = vld [vmem:[%s262 + $0x24] sm:$0xf]
        %v415 = vld [vmem:[%s262 + $0x28] sm:$0xf]
        %v416 = vld [vmem:[%s262 + $0x2c] sm:$0xf]
        %v417 = vld [vmem:[%s262 + $0x30] sm:$0xf]
        %v418 = vld [vmem:[%s262 + $0x34] sm:$0xf]
        %v419 = vld [vmem:[%s262 + $0x38] sm:$0xf]
        %v420 = vld [vmem:[%s262 + $0x3c] sm:$0xf]
        %v421 = vld [vmem:[%s262 + $0x40] sm:$0xf]
        %v422 = vld [vmem:[%s262 + $0x44] sm:$0xf]
        %v423 = vld [vmem:[%s262 + $0x48] sm:$0xf]
        %v424 = vld [vmem:[%s262 + $0x4c] sm:$0xf]
        %v425 = vld [vmem:[%s262 + $0x50] sm:$0xf]
        %v426 = vld [vmem:[%s262 + $0x54] sm:$0xf]
        %v427 = vld [vmem:[%s262 + $0x58] sm:$0xf]
        %v428 = vld [vmem:[%s262 + $0x5c] sm:$0xf]
        %v429 = vld [vmem:[%s262 + $0x60] sm:$0xf]
        %v430 = vld [vmem:[%s262 + $0x64] sm:$0xf]
        %v431 = vld [vmem:[%s262 + $0x68] sm:$0xf]
        %v432 = vld [vmem:[%s262 + $0x6c] sm:$0xf]
        %v433 = vld [vmem:[%s262 + $0x70] sm:$0xf]
        %v434 = vld [vmem:[%s262 + $0x74] sm:$0xf]
        %v435 = vld [vmem:[%s262 + $0x78] sm:$0xf]
        %v436 = vld [vmem:[%s262 + $0x7c] sm:$0xf]
        %v437 = vld [vmem:[%s262 + $0x80] sm:$0xf]
        %v438 = vld [vmem:[%s262 + $0x84] sm:$0xf]
        %v439 = vld [vmem:[%s262 + $0x88] sm:$0xf]
        %v440 = vld [vmem:[%s262 + $0x8c] sm:$0xf]
        %v441 = vld [vmem:[%s262 + $0x90] sm:$0xf]
        %v442 = vld [vmem:[%s262 + $0x94] sm:$0xf]
        %v443 = vld [vmem:[%s262 + $0x98] sm:$0xf]
        %v444 = vld [vmem:[%s262 + $0x9c] sm:$0xf]
        %v445 = vld [vmem:[%s262 + $0xa0] sm:$0xf]
        %v446 = vld [vmem:[%s262 + $0xa4] sm:$0xf]
        %v447 = vld [vmem:[%s262 + $0xa8] sm:$0xf]
        %v448 = vld [vmem:[%s262 + $0xac] sm:$0xf]
        %v449 = vld [vmem:[%s262 + $0xb0] sm:$0xf]
        %v450 = vld [vmem:[%s262 + $0xb4] sm:$0xf]
        %v451 = vld [vmem:[%s262 + $0xb8] sm:$0xf]
        %v452 = vld [vmem:[%s262 + $0xbc] sm:$0xf]
        %v453 = vld [vmem:[%s262 + $0xc0] sm:$0xf]
        %v454 = vld [vmem:[%s262 + $0xc4] sm:$0xf]
        %v455 = vld [vmem:[%s262 + $0xc8] sm:$0xf]
        %v456 = vld [vmem:[%s262 + $0xcc] sm:$0xf]
        %v457 = vld [vmem:[%s262 + $0xd0] sm:$0xf]
        %v458 = vld [vmem:[%s262 + $0xd4] sm:$0xf]
        %v459 = vld [vmem:[%s262 + $0xd8] sm:$0xf]
        %v460 = vld [vmem:[%s262 + $0xdc] sm:$0xf]
        %v461 = vld [vmem:[%s262 + $0xe0] sm:$0xf]
        %v462 = vld [vmem:[%s262 + $0xe4] sm:$0xf]
        %v463 = vld [vmem:[%s262 + $0xe8] sm:$0xf]
        %v464 = vld [vmem:[%s262 + $0xec] sm:$0xf]
        %v465 = vld [vmem:[%s262 + $0xf0] sm:$0xf]
        %v466 = vld [vmem:[%s262 + $0xf4] sm:$0xf]
        %v467 = vld [vmem:[%s262 + $0xf8] sm:$0xf]
        %v468 = vld [vmem:[%s262 + $0xfc] sm:$0xf]
        %v469 = vld [vmem:[%s268] sm:$0xf]
        %v470 = vld [vmem:[%s268 + $0x4] sm:$0xf]
        %v471 = vld [vmem:[%s268 + $0x8] sm:$0xf]
        %v472 = vld [vmem:[%s268 + $0xc] sm:$0xf]
        %v473 = vld [vmem:[%s268 + $0x10] sm:$0xf]
        %v474 = vld [vmem:[%s268 + $0x14] sm:$0xf]
        %v475 = vld [vmem:[%s268 + $0x18] sm:$0xf]
        %v476 = vld [vmem:[%s268 + $0x1c] sm:$0xf]
        %v541 = vunpack.c.l.b16 %v405
        %v542 = vunpack.c.l.b16 %v406
        %v543 = vunpack.c.l.b16 %v407
        %v544 = vunpack.c.l.b16 %v408
        %v545 = vunpack.c.l.b16 %v409
        %v546 = vunpack.c.l.b16 %v410
        %v547 = vunpack.c.l.b16 %v411
        %v548 = vunpack.c.l.b16 %v412
        %v549 = vunpack.c.l.b16 %v413
        %v550 = vunpack.c.l.b16 %v414
        %v551 = vunpack.c.l.b16 %v415
        %v552 = vunpack.c.l.b16 %v416
        %v553 = vunpack.c.l.b16 %v417
        %v554 = vunpack.c.l.b16 %v418
        %v555 = vunpack.c.l.b16 %v419
        %v556 = vunpack.c.l.b16 %v420
        %v557 = vunpack.c.l.b16 %v421
        %v558 = vunpack.c.l.b16 %v422
        %v559 = vunpack.c.l.b16 %v423
        %v560 = vunpack.c.l.b16 %v424
        %v561 = vunpack.c.l.b16 %v425
        %v562 = vunpack.c.l.b16 %v426
        %v563 = vunpack.c.l.b16 %v427
        %v564 = vunpack.c.l.b16 %v428
        %v565 = vunpack.c.l.b16 %v429
        %v566 = vunpack.c.l.b16 %v430
        %v567 = vunpack.c.l.b16 %v431
        %v568 = vunpack.c.l.b16 %v432
        %v569 = vunpack.c.l.b16 %v433
        %v570 = vunpack.c.l.b16 %v434
        %v571 = vunpack.c.l.b16 %v435
        %v572 = vunpack.c.l.b16 %v436
        %v573 = vunpack.c.l.b16 %v437
        %v574 = vunpack.c.l.b16 %v438
        %v575 = vunpack.c.l.b16 %v439
        %v576 = vunpack.c.l.b16 %v440
        %v577 = vunpack.c.l.b16 %v441
        %v578 = vunpack.c.l.b16 %v442
        %v579 = vunpack.c.l.b16 %v443
        %v580 = vunpack.c.l.b16 %v444
        %v581 = vunpack.c.l.b16 %v445
        %v582 = vunpack.c.l.b16 %v446
        %v583 = vunpack.c.l.b16 %v447
        %v584 = vunpack.c.l.b16 %v448
        %v585 = vunpack.c.l.b16 %v449
        %v586 = vunpack.c.l.b16 %v450
        %v587 = vunpack.c.l.b16 %v451
        %v588 = vunpack.c.l.b16 %v452
        %v589 = vunpack.c.l.b16 %v453
        %v590 = vunpack.c.l.b16 %v454
        %v591 = vunpack.c.l.b16 %v455
        %v592 = vunpack.c.l.b16 %v456
        %v593 = vunpack.c.l.b16 %v457
        %v594 = vunpack.c.l.b16 %v458
        %v595 = vunpack.c.l.b16 %v459
        %v596 = vunpack.c.l.b16 %v460
        %v597 = vunpack.c.l.b16 %v461
        %v598 = vunpack.c.l.b16 %v462
        %v599 = vunpack.c.l.b16 %v463
        %v600 = vunpack.c.l.b16 %v464
        %v601 = vunpack.c.l.b16 %v465
        %v602 = vunpack.c.l.b16 %v466
        %v603 = vunpack.c.l.b16 %v467
        %v604 = vunpack.c.l.b16 %v468
        %v605 = vpack.c.b16 %v542, %v541
        %v606 = vpack.c.b16 %v544, %v543
        %v607 = vpack.c.b16 %v546, %v545
        %v608 = vpack.c.b16 %v548, %v547
        %v609 = vpack.c.b16 %v550, %v549
        %v610 = vpack.c.b16 %v552, %v551
        %v611 = vpack.c.b16 %v554, %v553
        %v612 = vpack.c.b16 %v556, %v555
        %v613 = vpack.c.b16 %v558, %v557
        %v614 = vpack.c.b16 %v560, %v559
        %v615 = vpack.c.b16 %v562, %v561
        %v616 = vpack.c.b16 %v564, %v563
        %v617 = vpack.c.b16 %v566, %v565
        %v618 = vpack.c.b16 %v568, %v567
        %v619 = vpack.c.b16 %v570, %v569
        %v620 = vpack.c.b16 %v572, %v571
        %v621 = vpack.c.b16 %v574, %v573
        %v622 = vpack.c.b16 %v576, %v575
        %v623 = vpack.c.b16 %v578, %v577
        %v624 = vpack.c.b16 %v580, %v579
        %v625 = vpack.c.b16 %v582, %v581
        %v626 = vpack.c.b16 %v584, %v583
        %v627 = vpack.c.b16 %v586, %v585
        %v628 = vpack.c.b16 %v588, %v587
        %v629 = vpack.c.b16 %v590, %v589
        %v630 = vpack.c.b16 %v592, %v591
        %v631 = vpack.c.b16 %v594, %v593
        %v632 = vpack.c.b16 %v596, %v595
        %v633 = vpack.c.b16 %v598, %v597
        %v634 = vpack.c.b16 %v600, %v599
        %v635 = vpack.c.b16 %v602, %v601
        %v636 = vpack.c.b16 %v604, %v603
        %v645 = vunpack.c.l.b16 %v469
        %v646 = vunpack.c.l.b16 %v470
        %v647 = vunpack.c.l.b16 %v471
        %v648 = vunpack.c.l.b16 %v472
        %v649 = vunpack.c.l.b16 %v473
        %v650 = vunpack.c.l.b16 %v474
        %v651 = vunpack.c.l.b16 %v475
        %v652 = vunpack.c.l.b16 %v476
        %v653 = vpack.c.b16 %v646, %v645
        %v654 = vpack.c.b16 %v648, %v647
        %v655 = vpack.c.b16 %v650, %v649
        %v656 = vpack.c.b16 %v652, %v651
        %vm661 = vcmask 523264
        %v663 = vsel %vm661, %v605, 0
        %v666 = vsel %vm661, %v606, 0
        %v669 = vsel %vm661, %v607, 0
        %v672 = vsel %vm661, %v608, 0
        %v675 = vsel %vm661, %v609, 0
        %v678 = vsel %vm661, %v610, 0
        %v681 = vsel %vm661, %v611, 0
        %v684 = vsel %vm661, %v612, 0
        %v687 = vsel %vm661, %v613, 0
        %v690 = vsel %vm661, %v614, 0
        %v693 = vsel %vm661, %v615, 0
        %v696 = vsel %vm661, %v616, 0
        %v699 = vsel %vm661, %v617, 0
        %v702 = vsel %vm661, %v618, 0
        %v705 = vsel %vm661, %v619, 0
        %v708 = vsel %vm661, %v620, 0
        %v711 = vsel %vm661, %v621, 0
        %v714 = vsel %vm661, %v622, 0
        %v717 = vsel %vm661, %v623, 0
        %v720 = vsel %vm661, %v624, 0
        %v723 = vsel %vm661, %v625, 0
        %v726 = vsel %vm661, %v626, 0
        %v729 = vsel %vm661, %v627, 0
        %v732 = vsel %vm661, %v628, 0
        %v735 = vsel %vm661, %v629, 0
        %v738 = vsel %vm661, %v630, 0
        %v741 = vsel %vm661, %v631, 0
        %v744 = vsel %vm661, %v632, 0
        %v747 = vsel %vm661, %v633, 0
        %v750 = vsel %vm661, %v634, 0
        %v753 = vsel %vm661, %v635, 0
        %v756 = vsel %vm661, %v636, 0
        %758 = vmatprep.subr.bf16.mxu0 0
        %759 = vmatpush1.bf16.msra.mxu0 0
        %760 = vmatprep.subr.bf16.mxu0 0
        %761 = vmatpush1.bf16.msra.mxu0 0
        %762 = vmatprep.subr.bf16.mxu0 0
        %763 = vmatpush1.bf16.msra.mxu0 0
        %764 = vmatprep.subr.bf16.mxu0 0
        %765 = vmatpush1.bf16.msra.mxu0 0
        %766 = vmatprep.subr.bf16.mxu0 0
        %767 = vmatpush1.bf16.msra.mxu0 %v656
        %768 = vmatprep.subr.bf16.mxu0 0
        %769 = vmatpush1.bf16.msra.mxu0 %v655
        %770 = vmatprep.subr.bf16.mxu0 0
        %771 = vmatpush1.bf16.msra.mxu0 %v654
        %772 = vmatprep.subr.bf16.mxu0 0
        %773 = vmatpush1.bf16.msra.mxu0 %v653
        %774 = vmatprep.subr.bf16.mxu0 0
        %775 = vmatpush2.bf16.msra.mxu0 0
        %776 = vmatprep.subr.bf16.mxu0 0
        %777 = vmatpush2.bf16.msra.mxu0 0
        %778 = vmatprep.subr.bf16.mxu0 0
        %779 = vmatpush2.bf16.msra.mxu0 0
        %780 = vmatprep.subr.bf16.mxu0 0
        %781 = vmatpush2.bf16.msra.mxu0 0
        %782 = vmatprep.subr.bf16.mxu0 0
        %783 = vmatpush2.bf16.msra.mxu0 0
        %784 = vmatprep.subr.bf16.mxu0 0
        %785 = vmatpush2.bf16.msra.mxu0 0
        %786 = vmatprep.subr.bf16.mxu0 0
        %787 = vmatpush2.bf16.msra.mxu0 0
        %788 = vmatprep.subr.bf16.mxu0 0
        %789 = vmatpush2.bf16.msra.mxu0 0
        %790 = vmatprep.mubr.bf16.mxu0 0
        %791 = vmatmul.mubr.bf16.gmra.mxu0 %v663
        %v792 = vpop.f32.mrf.mxu0
        %v793 = vadd.f32 0.0, %v792
        %v794 = vpop.f32.mrf.mxu0
        %v795 = vpop.f32.mrf.mxu0
        %v796 = vadd.f32 0.0, %v795
        %v797 = vpop.f32.mrf.mxu0
        %798 = vmatprep.mubr.bf16.mxu0 0
        %799 = vmatmul.mubr.bf16.gmra.mxu0 %v666
        %v800 = vpop.f32.mrf.mxu0
        %v801 = vadd.f32 0.0, %v800
        %v802 = vpop.f32.mrf.mxu0
        %v803 = vpop.f32.mrf.mxu0
        %v804 = vadd.f32 0.0, %v803
        %v805 = vpop.f32.mrf.mxu0
        %806 = vmatprep.mubr.bf16.mxu0 0
        %807 = vmatmul.mubr.bf16.gmra.mxu0 %v669
        %v808 = vpop.f32.mrf.mxu0
        %v809 = vadd.f32 0.0, %v808
        %v810 = vpop.f32.mrf.mxu0
        %v811 = vpop.f32.mrf.mxu0
        %v812 = vadd.f32 0.0, %v811
        %v813 = vpop.f32.mrf.mxu0
        %814 = vmatprep.mubr.bf16.mxu0 0
        %815 = vmatmul.mubr.bf16.gmra.mxu0 %v672
        %v816 = vpop.f32.mrf.mxu0
        %v817 = vadd.f32 0.0, %v816
        %v818 = vpop.f32.mrf.mxu0
        %v819 = vpop.f32.mrf.mxu0
        %v820 = vadd.f32 0.0, %v819
        %v821 = vpop.f32.mrf.mxu0
        %822 = vmatprep.mubr.bf16.mxu0 0
        %823 = vmatmul.mubr.bf16.gmra.mxu0 %v675
        %v824 = vpop.f32.mrf.mxu0
        %v825 = vadd.f32 0.0, %v824
        %v826 = vpop.f32.mrf.mxu0
        %v827 = vpop.f32.mrf.mxu0
        %v828 = vadd.f32 0.0, %v827
        %v829 = vpop.f32.mrf.mxu0
        %830 = vmatprep.mubr.bf16.mxu0 0
        %831 = vmatmul.mubr.bf16.gmra.mxu0 %v678
        %v832 = vpop.f32.mrf.mxu0
        %v833 = vadd.f32 0.0, %v832
        %v834 = vpop.f32.mrf.mxu0
        %v835 = vpop.f32.mrf.mxu0
        %v836 = vadd.f32 0.0, %v835
        %v837 = vpop.f32.mrf.mxu0
        %838 = vmatprep.mubr.bf16.mxu0 0
        %839 = vmatmul.mubr.bf16.gmra.mxu0 %v681
        %v840 = vpop.f32.mrf.mxu0
        %v841 = vadd.f32 0.0, %v840
        %v842 = vpop.f32.mrf.mxu0
        %v843 = vpop.f32.mrf.mxu0
        %v844 = vadd.f32 0.0, %v843
        %v845 = vpop.f32.mrf.mxu0
        %846 = vmatprep.mubr.bf16.mxu0 0
        %847 = vmatmul.mubr.bf16.gmra.mxu0 %v684
        %v848 = vpop.f32.mrf.mxu0
        %v849 = vadd.f32 0.0, %v848
        %v850 = vpop.f32.mrf.mxu0
        %v851 = vpop.f32.mrf.mxu0
        %v852 = vadd.f32 0.0, %v851
        %v853 = vpop.f32.mrf.mxu0
        %854 = vmatprep.mubr.bf16.mxu0 0
        %855 = vmatmul.mubr.bf16.gmra.mxu0 %v687
        %v856 = vpop.f32.mrf.mxu0
        %v857 = vadd.f32 0.0, %v856
        %v858 = vpop.f32.mrf.mxu0
        %v859 = vpop.f32.mrf.mxu0
        %v860 = vadd.f32 0.0, %v859
        %v861 = vpop.f32.mrf.mxu0
        %862 = vmatprep.mubr.bf16.mxu0 0
        %863 = vmatmul.mubr.bf16.gmra.mxu0 %v690
        %v864 = vpop.f32.mrf.mxu0
        %v865 = vadd.f32 0.0, %v864
        %v866 = vpop.f32.mrf.mxu0
        %v867 = vpop.f32.mrf.mxu0
        %v868 = vadd.f32 0.0, %v867
        %v869 = vpop.f32.mrf.mxu0
        %870 = vmatprep.mubr.bf16.mxu0 0
        %871 = vmatmul.mubr.bf16.gmra.mxu0 %v693
        %v872 = vpop.f32.mrf.mxu0
        %v873 = vadd.f32 0.0, %v872
        %v874 = vpop.f32.mrf.mxu0
        %v875 = vpop.f32.mrf.mxu0
        %v876 = vadd.f32 0.0, %v875
        %v877 = vpop.f32.mrf.mxu0
        %878 = vmatprep.mubr.bf16.mxu0 0
        %879 = vmatmul.mubr.bf16.gmra.mxu0 %v696
        %v880 = vpop.f32.mrf.mxu0
        %v881 = vadd.f32 0.0, %v880
        %v882 = vpop.f32.mrf.mxu0
        %v883 = vpop.f32.mrf.mxu0
        %v884 = vadd.f32 0.0, %v883
        %v885 = vpop.f32.mrf.mxu0
        %886 = vmatprep.mubr.bf16.mxu0 0
        %887 = vmatmul.mubr.bf16.gmra.mxu0 %v699
        %v888 = vpop.f32.mrf.mxu0
        %v889 = vadd.f32 0.0, %v888
        %v890 = vpop.f32.mrf.mxu0
        %v891 = vpop.f32.mrf.mxu0
        %v892 = vadd.f32 0.0, %v891
        %v893 = vpop.f32.mrf.mxu0
        %894 = vmatprep.mubr.bf16.mxu0 0
        %895 = vmatmul.mubr.bf16.gmra.mxu0 %v702
        %v896 = vpop.f32.mrf.mxu0
        %v897 = vadd.f32 0.0, %v896
        %v898 = vpop.f32.mrf.mxu0
        %v899 = vpop.f32.mrf.mxu0
        %v900 = vadd.f32 0.0, %v899
        %v901 = vpop.f32.mrf.mxu0
        %902 = vmatprep.mubr.bf16.mxu0 0
        %903 = vmatmul.mubr.bf16.gmra.mxu0 %v705
        %v904 = vpop.f32.mrf.mxu0
        %v905 = vadd.f32 0.0, %v904
        %v906 = vpop.f32.mrf.mxu0
        %v907 = vpop.f32.mrf.mxu0
        %v908 = vadd.f32 0.0, %v907
        %v909 = vpop.f32.mrf.mxu0
        %910 = vmatprep.mubr.bf16.mxu0 0
        %911 = vmatmul.mubr.bf16.gmra.mxu0 %v708
        %v912 = vpop.f32.mrf.mxu0
        %v913 = vadd.f32 0.0, %v912
        %v914 = vpop.f32.mrf.mxu0
        %v915 = vpop.f32.mrf.mxu0
        %v916 = vadd.f32 0.0, %v915
        %v917 = vpop.f32.mrf.mxu0
        %918 = vmatprep.mubr.bf16.mxu0 0
        %919 = vmatmul.mubr.bf16.gmra.mxu0 %v711
        %v920 = vpop.f32.mrf.mxu0
        %v921 = vadd.f32 0.0, %v920
        %v922 = vpop.f32.mrf.mxu0
        %v923 = vpop.f32.mrf.mxu0
        %v924 = vadd.f32 0.0, %v923
        %v925 = vpop.f32.mrf.mxu0
        %926 = vmatprep.mubr.bf16.mxu0 0
        %927 = vmatmul.mubr.bf16.gmra.mxu0 %v714
        %v928 = vpop.f32.mrf.mxu0
        %v929 = vadd.f32 0.0, %v928
        %v930 = vpop.f32.mrf.mxu0
        %v931 = vpop.f32.mrf.mxu0
        %v932 = vadd.f32 0.0, %v931
        %v933 = vpop.f32.mrf.mxu0
        %934 = vmatprep.mubr.bf16.mxu0 0
        %935 = vmatmul.mubr.bf16.gmra.mxu0 %v717
        %v936 = vpop.f32.mrf.mxu0
        %v937 = vadd.f32 0.0, %v936
        %v938 = vpop.f32.mrf.mxu0
        %v939 = vpop.f32.mrf.mxu0
        %v940 = vadd.f32 0.0, %v939
        %v941 = vpop.f32.mrf.mxu0
        %942 = vmatprep.mubr.bf16.mxu0 0
        %943 = vmatmul.mubr.bf16.gmra.mxu0 %v720
        %v944 = vpop.f32.mrf.mxu0
        %v945 = vadd.f32 0.0, %v944
        %v946 = vpop.f32.mrf.mxu0
        %v947 = vpop.f32.mrf.mxu0
        %v948 = vadd.f32 0.0, %v947
        %v949 = vpop.f32.mrf.mxu0
        %950 = vmatprep.mubr.bf16.mxu0 0
        %951 = vmatmul.mubr.bf16.gmra.mxu0 %v723
        %v952 = vpop.f32.mrf.mxu0
        %v953 = vadd.f32 0.0, %v952
        %v954 = vpop.f32.mrf.mxu0
        %v955 = vpop.f32.mrf.mxu0
        %v956 = vadd.f32 0.0, %v955
        %v957 = vpop.f32.mrf.mxu0
        %958 = vmatprep.mubr.bf16.mxu0 0
        %959 = vmatmul.mubr.bf16.gmra.mxu0 %v726
        %v960 = vpop.f32.mrf.mxu0
        %v961 = vadd.f32 0.0, %v960
        %v962 = vpop.f32.mrf.mxu0
        %v963 = vpop.f32.mrf.mxu0
        %v964 = vadd.f32 0.0, %v963
        %v965 = vpop.f32.mrf.mxu0
        %966 = vmatprep.mubr.bf16.mxu0 0
        %967 = vmatmul.mubr.bf16.gmra.mxu0 %v729
        %v968 = vpop.f32.mrf.mxu0
        %v969 = vadd.f32 0.0, %v968
        %v970 = vpop.f32.mrf.mxu0
        %v971 = vpop.f32.mrf.mxu0
        %v972 = vadd.f32 0.0, %v971
        %v973 = vpop.f32.mrf.mxu0
        %974 = vmatprep.mubr.bf16.mxu0 0
        %975 = vmatmul.mubr.bf16.gmra.mxu0 %v732
        %v976 = vpop.f32.mrf.mxu0
        %v977 = vadd.f32 0.0, %v976
        %v978 = vpop.f32.mrf.mxu0
        %v979 = vpop.f32.mrf.mxu0
        %v980 = vadd.f32 0.0, %v979
        %v981 = vpop.f32.mrf.mxu0
        %982 = vmatprep.mubr.bf16.mxu0 0
        %983 = vmatmul.mubr.bf16.gmra.mxu0 %v735
        %v984 = vpop.f32.mrf.mxu0
        %v985 = vadd.f32 0.0, %v984
        %v986 = vpop.f32.mrf.mxu0
        %v987 = vpop.f32.mrf.mxu0
        %v988 = vadd.f32 0.0, %v987
        %v989 = vpop.f32.mrf.mxu0
        %990 = vmatprep.mubr.bf16.mxu0 0
        %991 = vmatmul.mubr.bf16.gmra.mxu0 %v738
        %v992 = vpop.f32.mrf.mxu0
        %v993 = vadd.f32 0.0, %v992
        %v994 = vpop.f32.mrf.mxu0
        %v995 = vpop.f32.mrf.mxu0
        %v996 = vadd.f32 0.0, %v995
        %v997 = vpop.f32.mrf.mxu0
        %998 = vmatprep.mubr.bf16.mxu0 0
        %999 = vmatmul.mubr.bf16.gmra.mxu0 %v741
        %v1000 = vpop.f32.mrf.mxu0
        %v1001 = vadd.f32 0.0, %v1000
        %v1002 = vpop.f32.mrf.mxu0
        %v1003 = vpop.f32.mrf.mxu0
        %v1004 = vadd.f32 0.0, %v1003
        %v1005 = vpop.f32.mrf.mxu0
        %1006 = vmatprep.mubr.bf16.mxu0 0
        %1007 = vmatmul.mubr.bf16.gmra.mxu0 %v744
        %v1008 = vpop.f32.mrf.mxu0
        %v1009 = vadd.f32 0.0, %v1008
        %v1010 = vpop.f32.mrf.mxu0
        %v1011 = vpop.f32.mrf.mxu0
        %v1012 = vadd.f32 0.0, %v1011
        %v1013 = vpop.f32.mrf.mxu0
        %1014 = vmatprep.mubr.bf16.mxu0 0
        %1015 = vmatmul.mubr.bf16.gmra.mxu0 %v747
        %v1016 = vpop.f32.mrf.mxu0
        %v1017 = vadd.f32 0.0, %v1016
        %v1018 = vpop.f32.mrf.mxu0
        %v1019 = vpop.f32.mrf.mxu0
        %v1020 = vadd.f32 0.0, %v1019
        %v1021 = vpop.f32.mrf.mxu0
        %1022 = vmatprep.mubr.bf16.mxu0 0
        %1023 = vmatmul.mubr.bf16.gmra.mxu0 %v750
        %v1024 = vpop.f32.mrf.mxu0
        %v1025 = vadd.f32 0.0, %v1024
        %v1026 = vpop.f32.mrf.mxu0
        %v1027 = vpop.f32.mrf.mxu0
        %v1028 = vadd.f32 0.0, %v1027
        %v1029 = vpop.f32.mrf.mxu0
        %1030 = vmatprep.mubr.bf16.mxu0 0
        %1031 = vmatmul.mubr.bf16.gmra.mxu0 %v753
        %v1032 = vpop.f32.mrf.mxu0
        %v1033 = vadd.f32 0.0, %v1032
        %v1034 = vpop.f32.mrf.mxu0
        %v1035 = vpop.f32.mrf.mxu0
        %v1036 = vadd.f32 0.0, %v1035
        %v1037 = vpop.f32.mrf.mxu0
        %1038 = vmatprep.mubr.bf16.mxu0 0
        %1039 = vmatmul.mubr.bf16.gmra.mxu0 %v756
        %v1040 = vpop.f32.mrf.mxu0
        %v1041 = vadd.f32 0.0, %v1040
        %v1042 = vpop.f32.mrf.mxu0
        %v1043 = vpop.f32.mrf.mxu0
        %v1044 = vadd.f32 0.0, %v1043
        %v1045 = vpop.f32.mrf.mxu0
        %1046 = vdwg.mxu0
        %v1047 = vadd.f32 %v341, %v793
        %v1048 = vadd.f32 %v342, %v796
        %v1049 = vadd.f32 %v343, %v801
        %v1050 = vadd.f32 %v344, %v804
        %v1051 = vadd.f32 %v345, %v809
        %v1052 = vadd.f32 %v346, %v812
        %v1053 = vadd.f32 %v347, %v817
        %v1054 = vadd.f32 %v348, %v820
        %v1055 = vadd.f32 %v349, %v825
        %v1056 = vadd.f32 %v350, %v828
        %v1057 = vadd.f32 %v351, %v833
        %v1058 = vadd.f32 %v352, %v836
        %v1059 = vadd.f32 %v353, %v841
        %v1060 = vadd.f32 %v354, %v844
        %v1061 = vadd.f32 %v355, %v849
        %v1062 = vadd.f32 %v356, %v852
        %v1063 = vadd.f32 %v357, %v857
        %v1064 = vadd.f32 %v358, %v860
        %v1065 = vadd.f32 %v359, %v865
        %v1066 = vadd.f32 %v360, %v868
        %v1067 = vadd.f32 %v361, %v873
        %v1068 = vadd.f32 %v362, %v876
        %v1069 = vadd.f32 %v363, %v881
        %v1070 = vadd.f32 %v364, %v884
        %v1071 = vadd.f32 %v365, %v889
        %v1072 = vadd.f32 %v366, %v892
        %v1073 = vadd.f32 %v367, %v897
        %v1074 = vadd.f32 %v368, %v900
        %v1075 = vadd.f32 %v369, %v905
        %v1076 = vadd.f32 %v370, %v908
        %v1077 = vadd.f32 %v371, %v913
        %v1078 = vadd.f32 %v372, %v916
        %v1079 = vadd.f32 %v373, %v921
        %v1080 = vadd.f32 %v374, %v924
        %v1081 = vadd.f32 %v375, %v929
        %v1082 = vadd.f32 %v376, %v932
        %v1083 = vadd.f32 %v377, %v937
        %v1084 = vadd.f32 %v378, %v940
        %v1085 = vadd.f32 %v379, %v945
        %v1086 = vadd.f32 %v380, %v948
        %v1087 = vadd.f32 %v381, %v953
        %v1088 = vadd.f32 %v382, %v956
        %v1089 = vadd.f32 %v383, %v961
        %v1090 = vadd.f32 %v384, %v964
        %v1091 = vadd.f32 %v385, %v969
        %v1092 = vadd.f32 %v386, %v972
        %v1093 = vadd.f32 %v387, %v977
        %v1094 = vadd.f32 %v388, %v980
        %v1095 = vadd.f32 %v389, %v985
        %v1096 = vadd.f32 %v390, %v988
        %v1097 = vadd.f32 %v391, %v993
        %v1098 = vadd.f32 %v392, %v996
        %v1099 = vadd.f32 %v393, %v1001
        %v1100 = vadd.f32 %v394, %v1004
        %v1101 = vadd.f32 %v395, %v1009
        %v1102 = vadd.f32 %v396, %v1012
        %v1103 = vadd.f32 %v397, %v1017
        %v1104 = vadd.f32 %v398, %v1020
        %v1105 = vadd.f32 %v399, %v1025
        %v1106 = vadd.f32 %v400, %v1028
        %v1107 = vadd.f32 %v401, %v1033
        %v1108 = vadd.f32 %v402, %v1036
        %v1109 = vadd.f32 %v403, %v1041
        %v1110 = vadd.f32 %v404, %v1044
        %vm1111 = vcmask 785408
        %1112 = vst.msk [vmem:[#allocation2] sm:$0xff] %vm1111, %v1047
        %1113 = vst.msk [vmem:[#allocation2 + $0x8] sm:$0xff] %vm1111, %v1048
        %1114 = vst.msk [vmem:[#allocation2 + $0x10] sm:$0xff] %vm1111, %v1049
        %1115 = vst.msk [vmem:[#allocation2 + $0x18] sm:$0xff] %vm1111, %v1050
        %1116 = vst.msk [vmem:[#allocation2 + $0x20] sm:$0xff] %vm1111, %v1051
        %1117 = vst.msk [vmem:[#allocation2 + $0x28] sm:$0xff] %vm1111, %v1052
        %1118 = vst.msk [vmem:[#allocation2 + $0x30] sm:$0xff] %vm1111, %v1053
        %1119 = vst.msk [vmem:[#allocation2 + $0x38] sm:$0xff] %vm1111, %v1054
        %1120 = vst.msk [vmem:[#allocation2 + $0x40] sm:$0xff] %vm1111, %v1055
        %1121 = vst.msk [vmem:[#allocation2 + $0x48] sm:$0xff] %vm1111, %v1056
        %1122 = vst.msk [vmem:[#allocation2 + $0x50] sm:$0xff] %vm1111, %v1057
        %1123 = vst.msk [vmem:[#allocation2 + $0x58] sm:$0xff] %vm1111, %v1058
        %1124 = vst.msk [vmem:[#allocation2 + $0x60] sm:$0xff] %vm1111, %v1059
        %1125 = vst.msk [vmem:[#allocation2 + $0x68] sm:$0xff] %vm1111, %v1060
        %1126 = vst.msk [vmem:[#allocation2 + $0x70] sm:$0xff] %vm1111, %v1061
        %1127 = vst.msk [vmem:[#allocation2 + $0x78] sm:$0xff] %vm1111, %v1062
        %1128 = vst.msk [vmem:[#allocation2 + $0x80] sm:$0xff] %vm1111, %v1063
        %1129 = vst.msk [vmem:[#allocation2 + $0x88] sm:$0xff] %vm1111, %v1064
        %1130 = vst.msk [vmem:[#allocation2 + $0x90] sm:$0xff] %vm1111, %v1065
        %1131 = vst.msk [vmem:[#allocation2 + $0x98] sm:$0xff] %vm1111, %v1066
        %1132 = vst.msk [vmem:[#allocation2 + $0xa0] sm:$0xff] %vm1111, %v1067
        %1133 = vst.msk [vmem:[#allocation2 + $0xa8] sm:$0xff] %vm1111, %v1068
        %1134 = vst.msk [vmem:[#allocation2 + $0xb0] sm:$0xff] %vm1111, %v1069
        %1135 = vst.msk [vmem:[#allocation2 + $0xb8] sm:$0xff] %vm1111, %v1070
        %1136 = vst.msk [vmem:[#allocation2 + $0xc0] sm:$0xff] %vm1111, %v1071
        %1137 = vst.msk [vmem:[#allocation2 + $0xc8] sm:$0xff] %vm1111, %v1072
        %1138 = vst.msk [vmem:[#allocation2 + $0xd0] sm:$0xff] %vm1111, %v1073
        %1139 = vst.msk [vmem:[#allocation2 + $0xd8] sm:$0xff] %vm1111, %v1074
        %1140 = vst.msk [vmem:[#allocation2 + $0xe0] sm:$0xff] %vm1111, %v1075
        %1141 = vst.msk [vmem:[#allocation2 + $0xe8] sm:$0xff] %vm1111, %v1076
        %1142 = vst.msk [vmem:[#allocation2 + $0xf0] sm:$0xff] %vm1111, %v1077
        %1143 = vst.msk [vmem:[#allocation2 + $0xf8] sm:$0xff] %vm1111, %v1078
        %1144 = vst.msk [vmem:[#allocation2 + $0x100] sm:$0xff] %vm1111, %v1079
        %1145 = vst.msk [vmem:[#allocation2 + $0x108] sm:$0xff] %vm1111, %v1080
        %1146 = vst.msk [vmem:[#allocation2 + $0x110] sm:$0xff] %vm1111, %v1081
        %1147 = vst.msk [vmem:[#allocation2 + $0x118] sm:$0xff] %vm1111, %v1082
        %1148 = vst.msk [vmem:[#allocation2 + $0x120] sm:$0xff] %vm1111, %v1083
        %1149 = vst.msk [vmem:[#allocation2 + $0x128] sm:$0xff] %vm1111, %v1084
        %1150 = vst.msk [vmem:[#allocation2 + $0x130] sm:$0xff] %vm1111, %v1085
        %1151 = vst.msk [vmem:[#allocation2 + $0x138] sm:$0xff] %vm1111, %v1086
        %1152 = vst.msk [vmem:[#allocation2 + $0x140] sm:$0xff] %vm1111, %v1087
        %1153 = vst.msk [vmem:[#allocation2 + $0x148] sm:$0xff] %vm1111, %v1088
        %1154 = vst.msk [vmem:[#allocation2 + $0x150] sm:$0xff] %vm1111, %v1089
        %1155 = vst.msk [vmem:[#allocation2 + $0x158] sm:$0xff] %vm1111, %v1090
        %1156 = vst.msk [vmem:[#allocation2 + $0x160] sm:$0xff] %vm1111, %v1091
        %1157 = vst.msk [vmem:[#allocation2 + $0x168] sm:$0xff] %vm1111, %v1092
        %1158 = vst.msk [vmem:[#allocation2 + $0x170] sm:$0xff] %vm1111, %v1093
        %1159 = vst.msk [vmem:[#allocation2 + $0x178] sm:$0xff] %vm1111, %v1094
        %1160 = vst.msk [vmem:[#allocation2 + $0x180] sm:$0xff] %vm1111, %v1095
        %1161 = vst.msk [vmem:[#allocation2 + $0x188] sm:$0xff] %vm1111, %v1096
        %1162 = vst.msk [vmem:[#allocation2 + $0x190] sm:$0xff] %vm1111, %v1097
        %1163 = vst.msk [vmem:[#allocation2 + $0x198] sm:$0xff] %vm1111, %v1098
        %1164 = vst.msk [vmem:[#allocation2 + $0x1a0] sm:$0xff] %vm1111, %v1099
        %1165 = vst.msk [vmem:[#allocation2 + $0x1a8] sm:$0xff] %vm1111, %v1100
        %1166 = vst.msk [vmem:[#allocation2 + $0x1b0] sm:$0xff] %vm1111, %v1101
        %1167 = vst.msk [vmem:[#allocation2 + $0x1b8] sm:$0xff] %vm1111, %v1102
        %1168 = vst.msk [vmem:[#allocation2 + $0x1c0] sm:$0xff] %vm1111, %v1103
        %1169 = vst.msk [vmem:[#allocation2 + $0x1c8] sm:$0xff] %vm1111, %v1104
        %1170 = vst.msk [vmem:[#allocation2 + $0x1d0] sm:$0xff] %vm1111, %v1105
        %1171 = vst.msk [vmem:[#allocation2 + $0x1d8] sm:$0xff] %vm1111, %v1106
        %1172 = vst.msk [vmem:[#allocation2 + $0x1e0] sm:$0xff] %vm1111, %v1107
        %1173 = vst.msk [vmem:[#allocation2 + $0x1e8] sm:$0xff] %vm1111, %v1108
        %1174 = vst.msk [vmem:[#allocation2 + $0x1f0] sm:$0xff] %vm1111, %v1109
        %1175 = vst.msk [vmem:[#allocation2 + $0x1f8] sm:$0xff] %vm1111, %v1110
        // Predicated region
        $region45: #{patch_embed_forward.1} parent=39 // pred_check
          %p1176 = pneg %p272
        $region46: #{patch_embed_forward.1} parent=39 // pred_check_branch
          %1178 = sbr.rel (%p1176) target = $region48
        $region47: #{patch_embed_forward.1} parent=39 // pred_region
          %v1179 = vld [vmem:[#allocation2] sm:$0xff]
          %v1180 = vld [vmem:[#allocation2 + $0x8] sm:$0xff]
          %v1181 = vld [vmem:[#allocation2 + $0x10] sm:$0xff]
          %v1182 = vld [vmem:[#allocation2 + $0x18] sm:$0xff]
          %v1183 = vld [vmem:[#allocation2 + $0x20] sm:$0xff]
          %v1184 = vld [vmem:[#allocation2 + $0x28] sm:$0xff]
          %v1185 = vld [vmem:[#allocation2 + $0x30] sm:$0xff]
          %v1186 = vld [vmem:[#allocation2 + $0x38] sm:$0xff]
          %v1187 = vld [vmem:[#allocation2 + $0x40] sm:$0xff]
          %v1188 = vld [vmem:[#allocation2 + $0x48] sm:$0xff]
          %v1189 = vld [vmem:[#allocation2 + $0x50] sm:$0xff]
          %v1190 = vld [vmem:[#allocation2 + $0x58] sm:$0xff]
          %v1191 = vld [vmem:[#allocation2 + $0x60] sm:$0xff]
          %v1192 = vld [vmem:[#allocation2 + $0x68] sm:$0xff]
          %v1193 = vld [vmem:[#allocation2 + $0x70] sm:$0xff]
          %v1194 = vld [vmem:[#allocation2 + $0x78] sm:$0xff]
          %v1195 = vld [vmem:[#allocation2 + $0x80] sm:$0xff]
          %v1196 = vld [vmem:[#allocation2 + $0x88] sm:$0xff]
          %v1197 = vld [vmem:[#allocation2 + $0x90] sm:$0xff]
          %v1198 = vld [vmem:[#allocation2 + $0x98] sm:$0xff]
          %v1199 = vld [vmem:[#allocation2 + $0xa0] sm:$0xff]
          %v1200 = vld [vmem:[#allocation2 + $0xa8] sm:$0xff]
          %v1201 = vld [vmem:[#allocation2 + $0xb0] sm:$0xff]
          %v1202 = vld [vmem:[#allocation2 + $0xb8] sm:$0xff]
          %v1203 = vld [vmem:[#allocation2 + $0xc0] sm:$0xff]
          %v1204 = vld [vmem:[#allocation2 + $0xc8] sm:$0xff]
          %v1205 = vld [vmem:[#allocation2 + $0xd0] sm:$0xff]
          %v1206 = vld [vmem:[#allocation2 + $0xd8] sm:$0xff]
          %v1207 = vld [vmem:[#allocation2 + $0xe0] sm:$0xff]
          %v1208 = vld [vmem:[#allocation2 + $0xe8] sm:$0xff]
          %v1209 = vld [vmem:[#allocation2 + $0xf0] sm:$0xff]
          %v1210 = vld [vmem:[#allocation2 + $0xf8] sm:$0xff]
          %v1211 = vld [vmem:[#allocation2 + $0x100] sm:$0xff]
          %v1212 = vld [vmem:[#allocation2 + $0x108] sm:$0xff]
          %v1213 = vld [vmem:[#allocation2 + $0x110] sm:$0xff]
          %v1214 = vld [vmem:[#allocation2 + $0x118] sm:$0xff]
          %v1215 = vld [vmem:[#allocation2 + $0x120] sm:$0xff]
          %v1216 = vld [vmem:[#allocation2 + $0x128] sm:$0xff]
          %v1217 = vld [vmem:[#allocation2 + $0x130] sm:$0xff]
          %v1218 = vld [vmem:[#allocation2 + $0x138] sm:$0xff]
          %v1219 = vld [vmem:[#allocation2 + $0x140] sm:$0xff]
          %v1220 = vld [vmem:[#allocation2 + $0x148] sm:$0xff]
          %v1221 = vld [vmem:[#allocation2 + $0x150] sm:$0xff]
          %v1222 = vld [vmem:[#allocation2 + $0x158] sm:$0xff]
          %v1223 = vld [vmem:[#allocation2 + $0x160] sm:$0xff]
          %v1224 = vld [vmem:[#allocation2 + $0x168] sm:$0xff]
          %v1225 = vld [vmem:[#allocation2 + $0x170] sm:$0xff]
          %v1226 = vld [vmem:[#allocation2 + $0x178] sm:$0xff]
          %v1227 = vld [vmem:[#allocation2 + $0x180] sm:$0xff]
          %v1228 = vld [vmem:[#allocation2 + $0x188] sm:$0xff]
          %v1229 = vld [vmem:[#allocation2 + $0x190] sm:$0xff]
          %v1230 = vld [vmem:[#allocation2 + $0x198] sm:$0xff]
          %v1231 = vld [vmem:[#allocation2 + $0x1a0] sm:$0xff]
          %v1232 = vld [vmem:[#allocation2 + $0x1a8] sm:$0xff]
          %v1233 = vld [vmem:[#allocation2 + $0x1b0] sm:$0xff]
          %v1234 = vld [vmem:[#allocation2 + $0x1b8] sm:$0xff]
          %v1235 = vld [vmem:[#allocation2 + $0x1c0] sm:$0xff]
          %v1236 = vld [vmem:[#allocation2 + $0x1c8] sm:$0xff]
          %v1237 = vld [vmem:[#allocation2 + $0x1d0] sm:$0xff]
          %v1238 = vld [vmem:[#allocation2 + $0x1d8] sm:$0xff]
          %v1239 = vld [vmem:[#allocation2 + $0x1e0] sm:$0xff]
          %v1240 = vld [vmem:[#allocation2 + $0x1e8] sm:$0xff]
          %v1241 = vld [vmem:[#allocation2 + $0x1f0] sm:$0xff]
          %v1242 = vld [vmem:[#allocation2 + $0x1f8] sm:$0xff]
          %v1243 = vld [vmem:[%s2] sm:$0x1]
          %v1245 = vlaneseq
          %v1246 = vshrl.u32 %v1245, 7
          %v1247 = vsub.s32 0, %v1246
          %v1248 = vrot.slane %v1243, %v1247
          %v1250 = vadd.f32 %v1179, %v1248
          %v1251 = vadd.f32 %v1180, %v1248
          %v1252 = vadd.f32 %v1181, %v1248
          %v1253 = vadd.f32 %v1182, %v1248
          %v1254 = vadd.f32 %v1183, %v1248
          %v1255 = vadd.f32 %v1184, %v1248
          %v1256 = vadd.f32 %v1185, %v1248
          %v1257 = vadd.f32 %v1186, %v1248
          %v1258 = vadd.f32 %v1187, %v1248
          %v1259 = vadd.f32 %v1188, %v1248
          %v1260 = vadd.f32 %v1189, %v1248
          %v1261 = vadd.f32 %v1190, %v1248
          %v1262 = vadd.f32 %v1191, %v1248
          %v1263 = vadd.f32 %v1192, %v1248
          %v1264 = vadd.f32 %v1193, %v1248
          %v1265 = vadd.f32 %v1194, %v1248
          %v1266 = vadd.f32 %v1195, %v1248
          %v1267 = vadd.f32 %v1196, %v1248
          %v1268 = vadd.f32 %v1197, %v1248
          %v1269 = vadd.f32 %v1198, %v1248
          %v1270 = vadd.f32 %v1199, %v1248
          %v1271 = vadd.f32 %v1200, %v1248
          %v1272 = vadd.f32 %v1201, %v1248
          %v1273 = vadd.f32 %v1202, %v1248
          %v1274 = vadd.f32 %v1203, %v1248
          %v1275 = vadd.f32 %v1204, %v1248
          %v1276 = vadd.f32 %v1205, %v1248
          %v1277 = vadd.f32 %v1206, %v1248
          %v1278 = vadd.f32 %v1207, %v1248
          %v1279 = vadd.f32 %v1208, %v1248
          %v1280 = vadd.f32 %v1209, %v1248
          %v1281 = vadd.f32 %v1210, %v1248
          %v1282 = vadd.f32 %v1211, %v1248
          %v1283 = vadd.f32 %v1212, %v1248
          %v1284 = vadd.f32 %v1213, %v1248
          %v1285 = vadd.f32 %v1214, %v1248
          %v1286 = vadd.f32 %v1215, %v1248
          %v1287 = vadd.f32 %v1216, %v1248
          %v1288 = vadd.f32 %v1217, %v1248
          %v1289 = vadd.f32 %v1218, %v1248
          %v1290 = vadd.f32 %v1219, %v1248
          %v1291 = vadd.f32 %v1220, %v1248
          %v1292 = vadd.f32 %v1221, %v1248
          %v1293 = vadd.f32 %v1222, %v1248
          %v1294 = vadd.f32 %v1223, %v1248
          %v1295 = vadd.f32 %v1224, %v1248
          %v1296 = vadd.f32 %v1225, %v1248
          %v1297 = vadd.f32 %v1226, %v1248
          %v1298 = vadd.f32 %v1227, %v1248
          %v1299 = vadd.f32 %v1228, %v1248
          %v1300 = vadd.f32 %v1229, %v1248
          %v1301 = vadd.f32 %v1230, %v1248
          %v1302 = vadd.f32 %v1231, %v1248
          %v1303 = vadd.f32 %v1232, %v1248
          %v1304 = vadd.f32 %v1233, %v1248
          %v1305 = vadd.f32 %v1234, %v1248
          %v1306 = vadd.f32 %v1235, %v1248
          %v1307 = vadd.f32 %v1236, %v1248
          %v1308 = vadd.f32 %v1237, %v1248
          %v1309 = vadd.f32 %v1238, %v1248
          %v1310 = vadd.f32 %v1239, %v1248
          %v1311 = vadd.f32 %v1240, %v1248
          %v1312 = vadd.f32 %v1241, %v1248
          %v1313 = vadd.f32 %v1242, %v1248
          %v1314 = vsel %vm1111, %v1250, 0.0
          %1315 = vadd.xlane.f32.xlu0 %v1314
          %v1316 = vpop.xlane.xlu0 %1315
          %v1317 = vsel %vm1111, %v1251, 0.0
          %1318 = vadd.xlane.f32.xlu0 %v1317
          %v1319 = vpop.xlane.xlu0 %1318
          %v1320 = vsel %vm1111, %v1252, 0.0
          %1321 = vadd.xlane.f32.xlu0 %v1320
          %v1322 = vpop.xlane.xlu0 %1321
          %v1323 = vsel %vm1111, %v1253, 0.0
          %1324 = vadd.xlane.f32.xlu0 %v1323
          %v1325 = vpop.xlane.xlu0 %1324
          %v1326 = vsel %vm1111, %v1254, 0.0
          %1327 = vadd.xlane.f32.xlu0 %v1326
          %v1328 = vpop.xlane.xlu0 %1327
          %v1329 = vsel %vm1111, %v1255, 0.0
          %1330 = vadd.xlane.f32.xlu0 %v1329
          %v1331 = vpop.xlane.xlu0 %1330
          %v1332 = vsel %vm1111, %v1256, 0.0
          %1333 = vadd.xlane.f32.xlu0 %v1332
          %v1334 = vpop.xlane.xlu0 %1333
          %v1335 = vsel %vm1111, %v1257, 0.0
          %1336 = vadd.xlane.f32.xlu0 %v1335
          %v1337 = vpop.xlane.xlu0 %1336
          %v1338 = vsel %vm1111, %v1258, 0.0
          %1339 = vadd.xlane.f32.xlu0 %v1338
          %v1340 = vpop.xlane.xlu0 %1339
          %v1341 = vsel %vm1111, %v1259, 0.0
          %1342 = vadd.xlane.f32.xlu0 %v1341
          %v1343 = vpop.xlane.xlu0 %1342
          %v1344 = vsel %vm1111, %v1260, 0.0
          %1345 = vadd.xlane.f32.xlu0 %v1344
          %v1346 = vpop.xlane.xlu0 %1345
          %v1347 = vsel %vm1111, %v1261, 0.0
          %1348 = vadd.xlane.f32.xlu0 %v1347
          %v1349 = vpop.xlane.xlu0 %1348
          %v1350 = vsel %vm1111, %v1262, 0.0
          %1351 = vadd.xlane.f32.xlu0 %v1350
          %v1352 = vpop.xlane.xlu0 %1351
          %v1353 = vsel %vm1111, %v1263, 0.0
          %1354 = vadd.xlane.f32.xlu0 %v1353
          %v1355 = vpop.xlane.xlu0 %1354
          %v1356 = vsel %vm1111, %v1264, 0.0
          %1357 = vadd.xlane.f32.xlu0 %v1356
          %v1358 = vpop.xlane.xlu0 %1357
          %v1359 = vsel %vm1111, %v1265, 0.0
          %1360 = vadd.xlane.f32.xlu0 %v1359
          %v1361 = vpop.xlane.xlu0 %1360
          %v1362 = vsel %vm1111, %v1266, 0.0
          %1363 = vadd.xlane.f32.xlu0 %v1362
          %v1364 = vpop.xlane.xlu0 %1363
          %v1365 = vsel %vm1111, %v1267, 0.0
          %1366 = vadd.xlane.f32.xlu0 %v1365
          %v1367 = vpop.xlane.xlu0 %1366
          %v1368 = vsel %vm1111, %v1268, 0.0
          %1369 = vadd.xlane.f32.xlu0 %v1368
          %v1370 = vpop.xlane.xlu0 %1369
          %v1371 = vsel %vm1111, %v1269, 0.0
          %1372 = vadd.xlane.f32.xlu0 %v1371
          %v1373 = vpop.xlane.xlu0 %1372
          %v1374 = vsel %vm1111, %v1270, 0.0
          %1375 = vadd.xlane.f32.xlu0 %v1374
          %v1376 = vpop.xlane.xlu0 %1375
          %v1377 = vsel %vm1111, %v1271, 0.0
          %1378 = vadd.xlane.f32.xlu0 %v1377
          %v1379 = vpop.xlane.xlu0 %1378
          %v1380 = vsel %vm1111, %v1272, 0.0
          %1381 = vadd.xlane.f32.xlu0 %v1380
          %v1382 = vpop.xlane.xlu0 %1381
          %v1383 = vsel %vm1111, %v1273, 0.0
          %1384 = vadd.xlane.f32.xlu0 %v1383
          %v1385 = vpop.xlane.xlu0 %1384
          %v1386 = vsel %vm1111, %v1274, 0.0
          %1387 = vadd.xlane.f32.xlu0 %v1386
          %v1388 = vpop.xlane.xlu0 %1387
          %v1389 = vsel %vm1111, %v1275, 0.0
          %1390 = vadd.xlane.f32.xlu0 %v1389
          %v1391 = vpop.xlane.xlu0 %1390
          %v1392 = vsel %vm1111, %v1276, 0.0
          %1393 = vadd.xlane.f32.xlu0 %v1392
          %v1394 = vpop.xlane.xlu0 %1393
          %v1395 = vsel %vm1111, %v1277, 0.0
          %1396 = vadd.xlane.f32.xlu0 %v1395
          %v1397 = vpop.xlane.xlu0 %1396
          %v1398 = vsel %vm1111, %v1278, 0.0
          %1399 = vadd.xlane.f32.xlu0 %v1398
          %v1400 = vpop.xlane.xlu0 %1399
          %v1401 = vsel %vm1111, %v1279, 0.0
          %1402 = vadd.xlane.f32.xlu0 %v1401
          %v1403 = vpop.xlane.xlu0 %1402
          %v1404 = vsel %vm1111, %v1280, 0.0
          %1405 = vadd.xlane.f32.xlu0 %v1404
          %v1406 = vpop.xlane.xlu0 %1405
          %v1407 = vsel %vm1111, %v1281, 0.0
          %1408 = vadd.xlane.f32.xlu0 %v1407
          %v1409 = vpop.xlane.xlu0 %1408
          %v1410 = vsel %vm1111, %v1282, 0.0
          %1411 = vadd.xlane.f32.xlu0 %v1410
          %v1412 = vpop.xlane.xlu0 %1411
          %v1413 = vsel %vm1111, %v1283, 0.0
          %1414 = vadd.xlane.f32.xlu0 %v1413
          %v1415 = vpop.xlane.xlu0 %1414
          %v1416 = vsel %vm1111, %v1284, 0.0
          %1417 = vadd.xlane.f32.xlu0 %v1416
          %v1418 = vpop.xlane.xlu0 %1417
          %v1419 = vsel %vm1111, %v1285, 0.0
          %1420 = vadd.xlane.f32.xlu0 %v1419
          %v1421 = vpop.xlane.xlu0 %1420
          %v1422 = vsel %vm1111, %v1286, 0.0
          %1423 = vadd.xlane.f32.xlu0 %v1422
          %v1424 = vpop.xlane.xlu0 %1423
          %v1425 = vsel %vm1111, %v1287, 0.0
          %1426 = vadd.xlane.f32.xlu0 %v1425
          %v1427 = vpop.xlane.xlu0 %1426
          %v1428 = vsel %vm1111, %v1288, 0.0
          %1429 = vadd.xlane.f32.xlu0 %v1428
          %v1430 = vpop.xlane.xlu0 %1429
          %v1431 = vsel %vm1111, %v1289, 0.0
          %1432 = vadd.xlane.f32.xlu0 %v1431
          %v1433 = vpop.xlane.xlu0 %1432
          %v1434 = vsel %vm1111, %v1290, 0.0
          %1435 = vadd.xlane.f32.xlu0 %v1434
          %v1436 = vpop.xlane.xlu0 %1435
          %v1437 = vsel %vm1111, %v1291, 0.0
          %1438 = vadd.xlane.f32.xlu0 %v1437
          %v1439 = vpop.xlane.xlu0 %1438
          %v1440 = vsel %vm1111, %v1292, 0.0
          %1441 = vadd.xlane.f32.xlu0 %v1440
          %v1442 = vpop.xlane.xlu0 %1441
          %v1443 = vsel %vm1111, %v1293, 0.0
          %1444 = vadd.xlane.f32.xlu0 %v1443
          %v1445 = vpop.xlane.xlu0 %1444
          %v1446 = vsel %vm1111, %v1294, 0.0
          %1447 = vadd.xlane.f32.xlu0 %v1446
          %v1448 = vpop.xlane.xlu0 %1447
          %v1449 = vsel %vm1111, %v1295, 0.0
          %1450 = vadd.xlane.f32.xlu0 %v1449
          %v1451 = vpop.xlane.xlu0 %1450
          %v1452 = vsel %vm1111, %v1296, 0.0
          %1453 = vadd.xlane.f32.xlu0 %v1452
          %v1454 = vpop.xlane.xlu0 %1453
          %v1455 = vsel %vm1111, %v1297, 0.0
          %1456 = vadd.xlane.f32.xlu0 %v1455
          %v1457 = vpop.xlane.xlu0 %1456
          %v1458 = vsel %vm1111, %v1298, 0.0
          %1459 = vadd.xlane.f32.xlu0 %v1458
          %v1460 = vpop.xlane.xlu0 %1459
          %v1461 = vsel %vm1111, %v1299, 0.0
          %1462 = vadd.xlane.f32.xlu0 %v1461
          %v1463 = vpop.xlane.xlu0 %1462
          %v1464 = vsel %vm1111, %v1300, 0.0
          %1465 = vadd.xlane.f32.xlu0 %v1464
          %v1466 = vpop.xlane.xlu0 %1465
          %v1467 = vsel %vm1111, %v1301, 0.0
          %1468 = vadd.xlane.f32.xlu0 %v1467
          %v1469 = vpop.xlane.xlu0 %1468
          %v1470 = vsel %vm1111, %v1302, 0.0
          %1471 = vadd.xlane.f32.xlu0 %v1470
          %v1472 = vpop.xlane.xlu0 %1471
          %v1473 = vsel %vm1111, %v1303, 0.0
          %1474 = vadd.xlane.f32.xlu0 %v1473
          %v1475 = vpop.xlane.xlu0 %1474
          %v1476 = vsel %vm1111, %v1304, 0.0
          %1477 = vadd.xlane.f32.xlu0 %v1476
          %v1478 = vpop.xlane.xlu0 %1477
          %v1479 = vsel %vm1111, %v1305, 0.0
          %1480 = vadd.xlane.f32.xlu0 %v1479
          %v1481 = vpop.xlane.xlu0 %1480
          %v1482 = vsel %vm1111, %v1306, 0.0
          %1483 = vadd.xlane.f32.xlu0 %v1482
          %v1484 = vpop.xlane.xlu0 %1483
          %v1485 = vsel %vm1111, %v1307, 0.0
          %1486 = vadd.xlane.f32.xlu0 %v1485
          %v1487 = vpop.xlane.xlu0 %1486
          %v1488 = vsel %vm1111, %v1308, 0.0
          %1489 = vadd.xlane.f32.xlu0 %v1488
          %v1490 = vpop.xlane.xlu0 %1489
          %v1491 = vsel %vm1111, %v1309, 0.0
          %1492 = vadd.xlane.f32.xlu0 %v1491
          %v1493 = vpop.xlane.xlu0 %1492
          %v1494 = vsel %vm1111, %v1310, 0.0
          %1495 = vadd.xlane.f32.xlu0 %v1494
          %v1496 = vpop.xlane.xlu0 %1495
          %v1497 = vsel %vm1111, %v1311, 0.0
          %1498 = vadd.xlane.f32.xlu0 %v1497
          %v1499 = vpop.xlane.xlu0 %1498
          %v1500 = vsel %vm1111, %v1312, 0.0
          %1501 = vadd.xlane.f32.xlu0 %v1500
          %v1502 = vpop.xlane.xlu0 %1501
          %v1503 = vsel %vm1111, %v1313, 0.0
          %1504 = vadd.xlane.f32.xlu0 %v1503
          %v1505 = vpop.xlane.xlu0 %1504
          %v1506 = vrcp.pop 96.0
          %v1507 = vmul.f32 %v1316, %v1506
          %v1508 = vmul.f32 %v1319, %v1506
          %v1509 = vmul.f32 %v1322, %v1506
          %v1510 = vmul.f32 %v1325, %v1506
          %v1511 = vmul.f32 %v1328, %v1506
          %v1512 = vmul.f32 %v1331, %v1506
          %v1513 = vmul.f32 %v1334, %v1506
          %v1514 = vmul.f32 %v1337, %v1506
          %v1515 = vmul.f32 %v1340, %v1506
          %v1516 = vmul.f32 %v1343, %v1506
          %v1517 = vmul.f32 %v1346, %v1506
          %v1518 = vmul.f32 %v1349, %v1506
          %v1519 = vmul.f32 %v1352, %v1506
          %v1520 = vmul.f32 %v1355, %v1506
          %v1521 = vmul.f32 %v1358, %v1506
          %v1522 = vmul.f32 %v1361, %v1506
          %v1523 = vmul.f32 %v1364, %v1506
          %v1524 = vmul.f32 %v1367, %v1506
          %v1525 = vmul.f32 %v1370, %v1506
          %v1526 = vmul.f32 %v1373, %v1506
          %v1527 = vmul.f32 %v1376, %v1506
          %v1528 = vmul.f32 %v1379, %v1506
          %v1529 = vmul.f32 %v1382, %v1506
          %v1530 = vmul.f32 %v1385, %v1506
          %v1531 = vmul.f32 %v1388, %v1506
          %v1532 = vmul.f32 %v1391, %v1506
          %v1533 = vmul.f32 %v1394, %v1506
          %v1534 = vmul.f32 %v1397, %v1506
          %v1535 = vmul.f32 %v1400, %v1506
          %v1536 = vmul.f32 %v1403, %v1506
          %v1537 = vmul.f32 %v1406, %v1506
          %v1538 = vmul.f32 %v1409, %v1506
          %v1539 = vmul.f32 %v1412, %v1506
          %v1540 = vmul.f32 %v1415, %v1506
          %v1541 = vmul.f32 %v1418, %v1506
          %v1542 = vmul.f32 %v1421, %v1506
          %v1543 = vmul.f32 %v1424, %v1506
          %v1544 = vmul.f32 %v1427, %v1506
          %v1545 = vmul.f32 %v1430, %v1506
          %v1546 = vmul.f32 %v1433, %v1506
          %v1547 = vmul.f32 %v1436, %v1506
          %v1548 = vmul.f32 %v1439, %v1506
          %v1549 = vmul.f32 %v1442, %v1506
          %v1550 = vmul.f32 %v1445, %v1506
          %v1551 = vmul.f32 %v1448, %v1506
          %v1552 = vmul.f32 %v1451, %v1506
          %v1553 = vmul.f32 %v1454, %v1506
          %v1554 = vmul.f32 %v1457, %v1506
          %v1555 = vmul.f32 %v1460, %v1506
          %v1556 = vmul.f32 %v1463, %v1506
          %v1557 = vmul.f32 %v1466, %v1506
          %v1558 = vmul.f32 %v1469, %v1506
          %v1559 = vmul.f32 %v1472, %v1506
          %v1560 = vmul.f32 %v1475, %v1506
          %v1561 = vmul.f32 %v1478, %v1506
          %v1562 = vmul.f32 %v1481, %v1506
          %v1563 = vmul.f32 %v1484, %v1506
          %v1564 = vmul.f32 %v1487, %v1506
          %v1565 = vmul.f32 %v1490, %v1506
          %v1566 = vmul.f32 %v1493, %v1506
          %v1567 = vmul.f32 %v1496, %v1506
          %v1568 = vmul.f32 %v1499, %v1506
          %v1569 = vmul.f32 %v1502, %v1506
          %v1570 = vmul.f32 %v1505, %v1506
          %v1571 = vsub.f32 %v1250, %v1507
          %v1572 = vsub.f32 %v1251, %v1508
          %v1573 = vsub.f32 %v1252, %v1509
          %v1574 = vsub.f32 %v1253, %v1510
          %v1575 = vsub.f32 %v1254, %v1511
          %v1576 = vsub.f32 %v1255, %v1512
          %v1577 = vsub.f32 %v1256, %v1513
          %v1578 = vsub.f32 %v1257, %v1514
          %v1579 = vsub.f32 %v1258, %v1515
          %v1580 = vsub.f32 %v1259, %v1516
          %v1581 = vsub.f32 %v1260, %v1517
          %v1582 = vsub.f32 %v1261, %v1518
          %v1583 = vsub.f32 %v1262, %v1519
          %v1584 = vsub.f32 %v1263, %v1520
          %v1585 = vsub.f32 %v1264, %v1521
          %v1586 = vsub.f32 %v1265, %v1522
          %v1587 = vsub.f32 %v1266, %v1523
          %v1588 = vsub.f32 %v1267, %v1524
          %v1589 = vsub.f32 %v1268, %v1525
          %v1590 = vsub.f32 %v1269, %v1526
          %v1591 = vsub.f32 %v1270, %v1527
          %v1592 = vsub.f32 %v1271, %v1528
          %v1593 = vsub.f32 %v1272, %v1529
          %v1594 = vsub.f32 %v1273, %v1530
          %v1595 = vsub.f32 %v1274, %v1531
          %v1596 = vsub.f32 %v1275, %v1532
          %v1597 = vsub.f32 %v1276, %v1533
          %v1598 = vsub.f32 %v1277, %v1534
          %v1599 = vsub.f32 %v1278, %v1535
          %v1600 = vsub.f32 %v1279, %v1536
          %v1601 = vsub.f32 %v1280, %v1537
          %v1602 = vsub.f32 %v1281, %v1538
          %v1603 = vsub.f32 %v1282, %v1539
          %v1604 = vsub.f32 %v1283, %v1540
          %v1605 = vsub.f32 %v1284, %v1541
          %v1606 = vsub.f32 %v1285, %v1542
          %v1607 = vsub.f32 %v1286, %v1543
          %v1608 = vsub.f32 %v1287, %v1544
          %v1609 = vsub.f32 %v1288, %v1545
          %v1610 = vsub.f32 %v1289, %v1546
          %v1611 = vsub.f32 %v1290, %v1547
          %v1612 = vsub.f32 %v1291, %v1548
          %v1613 = vsub.f32 %v1292, %v1549
          %v1614 = vsub.f32 %v1293, %v1550
          %v1615 = vsub.f32 %v1294, %v1551
          %v1616 = vsub.f32 %v1295, %v1552
          %v1617 = vsub.f32 %v1296, %v1553
          %v1618 = vsub.f32 %v1297, %v1554
          %v1619 = vsub.f32 %v1298, %v1555
          %v1620 = vsub.f32 %v1299, %v1556
          %v1621 = vsub.f32 %v1300, %v1557
          %v1622 = vsub.f32 %v1301, %v1558
          %v1623 = vsub.f32 %v1302, %v1559
          %v1624 = vsub.f32 %v1303, %v1560
          %v1625 = vsub.f32 %v1304, %v1561
          %v1626 = vsub.f32 %v1305, %v1562
          %v1627 = vsub.f32 %v1306, %v1563
          %v1628 = vsub.f32 %v1307, %v1564
          %v1629 = vsub.f32 %v1308, %v1565
          %v1630 = vsub.f32 %v1309, %v1566
          %v1631 = vsub.f32 %v1310, %v1567
          %v1632 = vsub.f32 %v1311, %v1568
          %v1633 = vsub.f32 %v1312, %v1569
          %v1634 = vsub.f32 %v1313, %v1570
          %v1635 = vmul.f32 %v1571, %v1571
          %v1636 = vmul.f32 %v1572, %v1572
          %v1637 = vmul.f32 %v1573, %v1573
          %v1638 = vmul.f32 %v1574, %v1574
          %v1639 = vmul.f32 %v1575, %v1575
          %v1640 = vmul.f32 %v1576, %v1576
          %v1641 = vmul.f32 %v1577, %v1577
          %v1642 = vmul.f32 %v1578, %v1578
          %v1643 = vmul.f32 %v1579, %v1579
          %v1644 = vmul.f32 %v1580, %v1580
          %v1645 = vmul.f32 %v1581, %v1581
          %v1646 = vmul.f32 %v1582, %v1582
          %v1647 = vmul.f32 %v1583, %v1583
          %v1648 = vmul.f32 %v1584, %v1584
          %v1649 = vmul.f32 %v1585, %v1585
          %v1650 = vmul.f32 %v1586, %v1586
          %v1651 = vmul.f32 %v1587, %v1587
          %v1652 = vmul.f32 %v1588, %v1588
          %v1653 = vmul.f32 %v1589, %v1589
          %v1654 = vmul.f32 %v1590, %v1590
          %v1655 = vmul.f32 %v1591, %v1591
          %v1656 = vmul.f32 %v1592, %v1592
          %v1657 = vmul.f32 %v1593, %v1593
          %v1658 = vmul.f32 %v1594, %v1594
          %v1659 = vmul.f32 %v1595, %v1595
          %v1660 = vmul.f32 %v1596, %v1596
          %v1661 = vmul.f32 %v1597, %v1597
          %v1662 = vmul.f32 %v1598, %v1598
          %v1663 = vmul.f32 %v1599, %v1599
          %v1664 = vmul.f32 %v1600, %v1600
          %v1665 = vmul.f32 %v1601, %v1601
          %v1666 = vmul.f32 %v1602, %v1602
          %v1667 = vmul.f32 %v1603, %v1603
          %v1668 = vmul.f32 %v1604, %v1604
          %v1669 = vmul.f32 %v1605, %v1605
          %v1670 = vmul.f32 %v1606, %v1606
          %v1671 = vmul.f32 %v1607, %v1607
          %v1672 = vmul.f32 %v1608, %v1608
          %v1673 = vmul.f32 %v1609, %v1609
          %v1674 = vmul.f32 %v1610, %v1610
          %v1675 = vmul.f32 %v1611, %v1611
          %v1676 = vmul.f32 %v1612, %v1612
          %v1677 = vmul.f32 %v1613, %v1613
          %v1678 = vmul.f32 %v1614, %v1614
          %v1679 = vmul.f32 %v1615, %v1615
          %v1680 = vmul.f32 %v1616, %v1616
          %v1681 = vmul.f32 %v1617, %v1617
          %v1682 = vmul.f32 %v1618, %v1618
          %v1683 = vmul.f32 %v1619, %v1619
          %v1684 = vmul.f32 %v1620, %v1620
          %v1685 = vmul.f32 %v1621, %v1621
          %v1686 = vmul.f32 %v1622, %v1622
          %v1687 = vmul.f32 %v1623, %v1623
          %v1688 = vmul.f32 %v1624, %v1624
          %v1689 = vmul.f32 %v1625, %v1625
          %v1690 = vmul.f32 %v1626, %v1626
          %v1691 = vmul.f32 %v1627, %v1627
          %v1692 = vmul.f32 %v1628, %v1628
          %v1693 = vmul.f32 %v1629, %v1629
          %v1694 = vmul.f32 %v1630, %v1630
          %v1695 = vmul.f32 %v1631, %v1631
          %v1696 = vmul.f32 %v1632, %v1632
          %v1697 = vmul.f32 %v1633, %v1633
          %v1698 = vmul.f32 %v1634, %v1634
          %v1699 = vsel %vm1111, %v1635, 0.0
          %1700 = vadd.xlane.f32.xlu0 %v1699
          %v1701 = vpop.xlane.xlu0 %1700
          %v1702 = vsel %vm1111, %v1636, 0.0
          %1703 = vadd.xlane.f32.xlu0 %v1702
          %v1704 = vpop.xlane.xlu0 %1703
          %v1705 = vsel %vm1111, %v1637, 0.0
          %1706 = vadd.xlane.f32.xlu0 %v1705
          %v1707 = vpop.xlane.xlu0 %1706
          %v1708 = vsel %vm1111, %v1638, 0.0
          %1709 = vadd.xlane.f32.xlu0 %v1708
          %v1710 = vpop.xlane.xlu0 %1709
          %v1711 = vsel %vm1111, %v1639, 0.0
          %1712 = vadd.xlane.f32.xlu0 %v1711
          %v1713 = vpop.xlane.xlu0 %1712
          %v1714 = vsel %vm1111, %v1640, 0.0
          %1715 = vadd.xlane.f32.xlu0 %v1714
          %v1716 = vpop.xlane.xlu0 %1715
          %v1717 = vsel %vm1111, %v1641, 0.0
          %1718 = vadd.xlane.f32.xlu0 %v1717
          %v1719 = vpop.xlane.xlu0 %1718
          %v1720 = vsel %vm1111, %v1642, 0.0
          %1721 = vadd.xlane.f32.xlu0 %v1720
          %v1722 = vpop.xlane.xlu0 %1721
          %v1723 = vsel %vm1111, %v1643, 0.0
          %1724 = vadd.xlane.f32.xlu0 %v1723
          %v1725 = vpop.xlane.xlu0 %1724
          %v1726 = vsel %vm1111, %v1644, 0.0
          %1727 = vadd.xlane.f32.xlu0 %v1726
          %v1728 = vpop.xlane.xlu0 %1727
          %v1729 = vsel %vm1111, %v1645, 0.0
          %1730 = vadd.xlane.f32.xlu0 %v1729
          %v1731 = vpop.xlane.xlu0 %1730
          %v1732 = vsel %vm1111, %v1646, 0.0
          %1733 = vadd.xlane.f32.xlu0 %v1732
          %v1734 = vpop.xlane.xlu0 %1733
          %v1735 = vsel %vm1111, %v1647, 0.0
          %1736 = vadd.xlane.f32.xlu0 %v1735
          %v1737 = vpop.xlane.xlu0 %1736
          %v1738 = vsel %vm1111, %v1648, 0.0
          %1739 = vadd.xlane.f32.xlu0 %v1738
          %v1740 = vpop.xlane.xlu0 %1739
          %v1741 = vsel %vm1111, %v1649, 0.0
          %1742 = vadd.xlane.f32.xlu0 %v1741
          %v1743 = vpop.xlane.xlu0 %1742
          %v1744 = vsel %vm1111, %v1650, 0.0
          %1745 = vadd.xlane.f32.xlu0 %v1744
          %v1746 = vpop.xlane.xlu0 %1745
          %v1747 = vsel %vm1111, %v1651, 0.0
          %1748 = vadd.xlane.f32.xlu0 %v1747
          %v1749 = vpop.xlane.xlu0 %1748
          %v1750 = vsel %vm1111, %v1652, 0.0
          %1751 = vadd.xlane.f32.xlu0 %v1750
          %v1752 = vpop.xlane.xlu0 %1751
          %v1753 = vsel %vm1111, %v1653, 0.0
          %1754 = vadd.xlane.f32.xlu0 %v1753
          %v1755 = vpop.xlane.xlu0 %1754
          %v1756 = vsel %vm1111, %v1654, 0.0
          %1757 = vadd.xlane.f32.xlu0 %v1756
          %v1758 = vpop.xlane.xlu0 %1757
          %v1759 = vsel %vm1111, %v1655, 0.0
          %1760 = vadd.xlane.f32.xlu0 %v1759
          %v1761 = vpop.xlane.xlu0 %1760
          %v1762 = vsel %vm1111, %v1656, 0.0
          %1763 = vadd.xlane.f32.xlu0 %v1762
          %v1764 = vpop.xlane.xlu0 %1763
          %v1765 = vsel %vm1111, %v1657, 0.0
          %1766 = vadd.xlane.f32.xlu0 %v1765
          %v1767 = vpop.xlane.xlu0 %1766
          %v1768 = vsel %vm1111, %v1658, 0.0
          %1769 = vadd.xlane.f32.xlu0 %v1768
          %v1770 = vpop.xlane.xlu0 %1769
          %v1771 = vsel %vm1111, %v1659, 0.0
          %1772 = vadd.xlane.f32.xlu0 %v1771
          %v1773 = vpop.xlane.xlu0 %1772
          %v1774 = vsel %vm1111, %v1660, 0.0
          %1775 = vadd.xlane.f32.xlu0 %v1774
          %v1776 = vpop.xlane.xlu0 %1775
          %v1777 = vsel %vm1111, %v1661, 0.0
          %1778 = vadd.xlane.f32.xlu0 %v1777
          %v1779 = vpop.xlane.xlu0 %1778
          %v1780 = vsel %vm1111, %v1662, 0.0
          %1781 = vadd.xlane.f32.xlu0 %v1780
          %v1782 = vpop.xlane.xlu0 %1781
          %v1783 = vsel %vm1111, %v1663, 0.0
          %1784 = vadd.xlane.f32.xlu0 %v1783
          %v1785 = vpop.xlane.xlu0 %1784
          %v1786 = vsel %vm1111, %v1664, 0.0
          %1787 = vadd.xlane.f32.xlu0 %v1786
          %v1788 = vpop.xlane.xlu0 %1787
          %v1789 = vsel %vm1111, %v1665, 0.0
          %1790 = vadd.xlane.f32.xlu0 %v1789
          %v1791 = vpop.xlane.xlu0 %1790
          %v1792 = vsel %vm1111, %v1666, 0.0
          %1793 = vadd.xlane.f32.xlu0 %v1792
          %v1794 = vpop.xlane.xlu0 %1793
          %v1795 = vsel %vm1111, %v1667, 0.0
          %1796 = vadd.xlane.f32.xlu0 %v1795
          %v1797 = vpop.xlane.xlu0 %1796
          %v1798 = vsel %vm1111, %v1668, 0.0
          %1799 = vadd.xlane.f32.xlu0 %v1798
          %v1800 = vpop.xlane.xlu0 %1799
          %v1801 = vsel %vm1111, %v1669, 0.0
          %1802 = vadd.xlane.f32.xlu0 %v1801
          %v1803 = vpop.xlane.xlu0 %1802
          %v1804 = vsel %vm1111, %v1670, 0.0
          %1805 = vadd.xlane.f32.xlu0 %v1804
          %v1806 = vpop.xlane.xlu0 %1805
          %v1807 = vsel %vm1111, %v1671, 0.0
          %1808 = vadd.xlane.f32.xlu0 %v1807
          %v1809 = vpop.xlane.xlu0 %1808
          %v1810 = vsel %vm1111, %v1672, 0.0
          %1811 = vadd.xlane.f32.xlu0 %v1810
          %v1812 = vpop.xlane.xlu0 %1811
          %v1813 = vsel %vm1111, %v1673, 0.0
          %1814 = vadd.xlane.f32.xlu0 %v1813
          %v1815 = vpop.xlane.xlu0 %1814
          %v1816 = vsel %vm1111, %v1674, 0.0
          %1817 = vadd.xlane.f32.xlu0 %v1816
          %v1818 = vpop.xlane.xlu0 %1817
          %v1819 = vsel %vm1111, %v1675, 0.0
          %1820 = vadd.xlane.f32.xlu0 %v1819
          %v1821 = vpop.xlane.xlu0 %1820
          %v1822 = vsel %vm1111, %v1676, 0.0
          %1823 = vadd.xlane.f32.xlu0 %v1822
          %v1824 = vpop.xlane.xlu0 %1823
          %v1825 = vsel %vm1111, %v1677, 0.0
          %1826 = vadd.xlane.f32.xlu0 %v1825
          %v1827 = vpop.xlane.xlu0 %1826
          %v1828 = vsel %vm1111, %v1678, 0.0
          %1829 = vadd.xlane.f32.xlu0 %v1828
          %v1830 = vpop.xlane.xlu0 %1829
          %v1831 = vsel %vm1111, %v1679, 0.0
          %1832 = vadd.xlane.f32.xlu0 %v1831
          %v1833 = vpop.xlane.xlu0 %1832
          %v1834 = vsel %vm1111, %v1680, 0.0
          %1835 = vadd.xlane.f32.xlu0 %v1834
          %v1836 = vpop.xlane.xlu0 %1835
          %v1837 = vsel %vm1111, %v1681, 0.0
          %1838 = vadd.xlane.f32.xlu0 %v1837
          %v1839 = vpop.xlane.xlu0 %1838
          %v1840 = vsel %vm1111, %v1682, 0.0
          %1841 = vadd.xlane.f32.xlu0 %v1840
          %v1842 = vpop.xlane.xlu0 %1841
          %v1843 = vsel %vm1111, %v1683, 0.0
          %1844 = vadd.xlane.f32.xlu0 %v1843
          %v1845 = vpop.xlane.xlu0 %1844
          %v1846 = vsel %vm1111, %v1684, 0.0
          %1847 = vadd.xlane.f32.xlu0 %v1846
          %v1848 = vpop.xlane.xlu0 %1847
          %v1849 = vsel %vm1111, %v1685, 0.0
          %1850 = vadd.xlane.f32.xlu0 %v1849
          %v1851 = vpop.xlane.xlu0 %1850
          %v1852 = vsel %vm1111, %v1686, 0.0
          %1853 = vadd.xlane.f32.xlu0 %v1852
          %v1854 = vpop.xlane.xlu0 %1853
          %v1855 = vsel %vm1111, %v1687, 0.0
          %1856 = vadd.xlane.f32.xlu0 %v1855
          %v1857 = vpop.xlane.xlu0 %1856
          %v1858 = vsel %vm1111, %v1688, 0.0
          %1859 = vadd.xlane.f32.xlu0 %v1858
          %v1860 = vpop.xlane.xlu0 %1859
          %v1861 = vsel %vm1111, %v1689, 0.0
          %1862 = vadd.xlane.f32.xlu0 %v1861
          %v1863 = vpop.xlane.xlu0 %1862
          %v1864 = vsel %vm1111, %v1690, 0.0
          %1865 = vadd.xlane.f32.xlu0 %v1864
          %v1866 = vpop.xlane.xlu0 %1865
          %v1867 = vsel %vm1111, %v1691, 0.0
          %1868 = vadd.xlane.f32.xlu0 %v1867
          %v1869 = vpop.xlane.xlu0 %1868
          %v1870 = vsel %vm1111, %v1692, 0.0
          %1871 = vadd.xlane.f32.xlu0 %v1870
          %v1872 = vpop.xlane.xlu0 %1871
          %v1873 = vsel %vm1111, %v1693, 0.0
          %1874 = vadd.xlane.f32.xlu0 %v1873
          %v1875 = vpop.xlane.xlu0 %1874
          %v1876 = vsel %vm1111, %v1694, 0.0
          %1877 = vadd.xlane.f32.xlu0 %v1876
          %v1878 = vpop.xlane.xlu0 %1877
          %v1879 = vsel %vm1111, %v1695, 0.0
          %1880 = vadd.xlane.f32.xlu0 %v1879
          %v1881 = vpop.xlane.xlu0 %1880
          %v1882 = vsel %vm1111, %v1696, 0.0
          %1883 = vadd.xlane.f32.xlu0 %v1882
          %v1884 = vpop.xlane.xlu0 %1883
          %v1885 = vsel %vm1111, %v1697, 0.0
          %1886 = vadd.xlane.f32.xlu0 %v1885
          %v1887 = vpop.xlane.xlu0 %1886
          %v1888 = vsel %vm1111, %v1698, 0.0
          %1889 = vadd.xlane.f32.xlu0 %v1888
          %v1890 = vpop.xlane.xlu0 %1889
          %v1891 = vmul.f32 %v1701, %v1506
          %v1892 = vmul.f32 %v1704, %v1506
          %v1893 = vmul.f32 %v1707, %v1506
          %v1894 = vmul.f32 %v1710, %v1506
          %v1895 = vmul.f32 %v1713, %v1506
          %v1896 = vmul.f32 %v1716, %v1506
          %v1897 = vmul.f32 %v1719, %v1506
          %v1898 = vmul.f32 %v1722, %v1506
          %v1899 = vmul.f32 %v1725, %v1506
          %v1900 = vmul.f32 %v1728, %v1506
          %v1901 = vmul.f32 %v1731, %v1506
          %v1902 = vmul.f32 %v1734, %v1506
          %v1903 = vmul.f32 %v1737, %v1506
          %v1904 = vmul.f32 %v1740, %v1506
          %v1905 = vmul.f32 %v1743, %v1506
          %v1906 = vmul.f32 %v1746, %v1506
          %v1907 = vmul.f32 %v1749, %v1506
          %v1908 = vmul.f32 %v1752, %v1506
          %v1909 = vmul.f32 %v1755, %v1506
          %v1910 = vmul.f32 %v1758, %v1506
          %v1911 = vmul.f32 %v1761, %v1506
          %v1912 = vmul.f32 %v1764, %v1506
          %v1913 = vmul.f32 %v1767, %v1506
          %v1914 = vmul.f32 %v1770, %v1506
          %v1915 = vmul.f32 %v1773, %v1506
          %v1916 = vmul.f32 %v1776, %v1506
          %v1917 = vmul.f32 %v1779, %v1506
          %v1918 = vmul.f32 %v1782, %v1506
          %v1919 = vmul.f32 %v1785, %v1506
          %v1920 = vmul.f32 %v1788, %v1506
          %v1921 = vmul.f32 %v1791, %v1506
          %v1922 = vmul.f32 %v1794, %v1506
          %v1923 = vmul.f32 %v1797, %v1506
          %v1924 = vmul.f32 %v1800, %v1506
          %v1925 = vmul.f32 %v1803, %v1506
          %v1926 = vmul.f32 %v1806, %v1506
          %v1927 = vmul.f32 %v1809, %v1506
          %v1928 = vmul.f32 %v1812, %v1506
          %v1929 = vmul.f32 %v1815, %v1506
          %v1930 = vmul.f32 %v1818, %v1506
          %v1931 = vmul.f32 %v1821, %v1506
          %v1932 = vmul.f32 %v1824, %v1506
          %v1933 = vmul.f32 %v1827, %v1506
          %v1934 = vmul.f32 %v1830, %v1506
          %v1935 = vmul.f32 %v1833, %v1506
          %v1936 = vmul.f32 %v1836, %v1506
          %v1937 = vmul.f32 %v1839, %v1506
          %v1938 = vmul.f32 %v1842, %v1506
          %v1939 = vmul.f32 %v1845, %v1506
          %v1940 = vmul.f32 %v1848, %v1506
          %v1941 = vmul.f32 %v1851, %v1506
          %v1942 = vmul.f32 %v1854, %v1506
          %v1943 = vmul.f32 %v1857, %v1506
          %v1944 = vmul.f32 %v1860, %v1506
          %v1945 = vmul.f32 %v1863, %v1506
          %v1946 = vmul.f32 %v1866, %v1506
          %v1947 = vmul.f32 %v1869, %v1506
          %v1948 = vmul.f32 %v1872, %v1506
          %v1949 = vmul.f32 %v1875, %v1506
          %v1950 = vmul.f32 %v1878, %v1506
          %v1951 = vmul.f32 %v1881, %v1506
          %v1952 = vmul.f32 %v1884, %v1506
          %v1953 = vmul.f32 %v1887, %v1506
          %v1954 = vmul.f32 %v1890, %v1506
          %v1955 = vadd.f32 %v1891, 1e-05
          %v1956 = vadd.f32 %v1892, 1e-05
          %v1957 = vadd.f32 %v1893, 1e-05
          %v1958 = vadd.f32 %v1894, 1e-05
          %v1959 = vadd.f32 %v1895, 1e-05
          %v1960 = vadd.f32 %v1896, 1e-05
          %v1961 = vadd.f32 %v1897, 1e-05
          %v1962 = vadd.f32 %v1898, 1e-05
          %v1963 = vadd.f32 %v1899, 1e-05
          %v1964 = vadd.f32 %v1900, 1e-05
          %v1965 = vadd.f32 %v1901, 1e-05
          %v1966 = vadd.f32 %v1902, 1e-05
          %v1967 = vadd.f32 %v1903, 1e-05
          %v1968 = vadd.f32 %v1904, 1e-05
          %v1969 = vadd.f32 %v1905, 1e-05
          %v1970 = vadd.f32 %v1906, 1e-05
          %v1971 = vadd.f32 %v1907, 1e-05
          %v1972 = vadd.f32 %v1908, 1e-05
          %v1973 = vadd.f32 %v1909, 1e-05
          %v1974 = vadd.f32 %v1910, 1e-05
          %v1975 = vadd.f32 %v1911, 1e-05
          %v1976 = vadd.f32 %v1912, 1e-05
          %v1977 = vadd.f32 %v1913, 1e-05
          %v1978 = vadd.f32 %v1914, 1e-05
          %v1979 = vadd.f32 %v1915, 1e-05
          %v1980 = vadd.f32 %v1916, 1e-05
          %v1981 = vadd.f32 %v1917, 1e-05
          %v1982 = vadd.f32 %v1918, 1e-05
          %v1983 = vadd.f32 %v1919, 1e-05
          %v1984 = vadd.f32 %v1920, 1e-05
          %v1985 = vadd.f32 %v1921, 1e-05
          %v1986 = vadd.f32 %v1922, 1e-05
          %v1987 = vadd.f32 %v1923, 1e-05
          %v1988 = vadd.f32 %v1924, 1e-05
          %v1989 = vadd.f32 %v1925, 1e-05
          %v1990 = vadd.f32 %v1926, 1e-05
          %v1991 = vadd.f32 %v1927, 1e-05
          %v1992 = vadd.f32 %v1928, 1e-05
          %v1993 = vadd.f32 %v1929, 1e-05
          %v1994 = vadd.f32 %v1930, 1e-05
          %v1995 = vadd.f32 %v1931, 1e-05
          %v1996 = vadd.f32 %v1932, 1e-05
          %v1997 = vadd.f32 %v1933, 1e-05
          %v1998 = vadd.f32 %v1934, 1e-05
          %v1999 = vadd.f32 %v1935, 1e-05
          %v2000 = vadd.f32 %v1936, 1e-05
          %v2001 = vadd.f32 %v1937, 1e-05
          %v2002 = vadd.f32 %v1938, 1e-05
          %v2003 = vadd.f32 %v1939, 1e-05
          %v2004 = vadd.f32 %v1940, 1e-05
          %v2005 = vadd.f32 %v1941, 1e-05
          %v2006 = vadd.f32 %v1942, 1e-05
          %v2007 = vadd.f32 %v1943, 1e-05
          %v2008 = vadd.f32 %v1944, 1e-05
          %v2009 = vadd.f32 %v1945, 1e-05
          %v2010 = vadd.f32 %v1946, 1e-05
          %v2011 = vadd.f32 %v1947, 1e-05
          %v2012 = vadd.f32 %v1948, 1e-05
          %v2013 = vadd.f32 %v1949, 1e-05
          %v2014 = vadd.f32 %v1950, 1e-05
          %v2015 = vadd.f32 %v1951, 1e-05
          %v2016 = vadd.f32 %v1952, 1e-05
          %v2017 = vadd.f32 %v1953, 1e-05
          %v2018 = vadd.f32 %v1954, 1e-05
          %v2019 = vrsqrt.pop %v1955
          %v2020 = vrsqrt.pop %v1956
          %v2021 = vrsqrt.pop %v1957
          %v2022 = vrsqrt.pop %v1958
          %v2023 = vrsqrt.pop %v1959
          %v2024 = vrsqrt.pop %v1960
          %v2025 = vrsqrt.pop %v1961
          %v2026 = vrsqrt.pop %v1962
          %v2027 = vrsqrt.pop %v1963
          %v2028 = vrsqrt.pop %v1964
          %v2029 = vrsqrt.pop %v1965
          %v2030 = vrsqrt.pop %v1966
          %v2031 = vrsqrt.pop %v1967
          %v2032 = vrsqrt.pop %v1968
          %v2033 = vrsqrt.pop %v1969
          %v2034 = vrsqrt.pop %v1970
          %v2035 = vrsqrt.pop %v1971
          %v2036 = vrsqrt.pop %v1972
          %v2037 = vrsqrt.pop %v1973
          %v2038 = vrsqrt.pop %v1974
          %v2039 = vrsqrt.pop %v1975
          %v2040 = vrsqrt.pop %v1976
          %v2041 = vrsqrt.pop %v1977
          %v2042 = vrsqrt.pop %v1978
          %v2043 = vrsqrt.pop %v1979
          %v2044 = vrsqrt.pop %v1980
          %v2045 = vrsqrt.pop %v1981
          %v2046 = vrsqrt.pop %v1982
          %v2047 = vrsqrt.pop %v1983
          %v2048 = vrsqrt.pop %v1984
          %v2049 = vrsqrt.pop %v1985
          %v2050 = vrsqrt.pop %v1986
          %v2051 = vrsqrt.pop %v1987
          %v2052 = vrsqrt.pop %v1988
          %v2053 = vrsqrt.pop %v1989
          %v2054 = vrsqrt.pop %v1990
          %v2055 = vrsqrt.pop %v1991
          %v2056 = vrsqrt.pop %v1992
          %v2057 = vrsqrt.pop %v1993
          %v2058 = vrsqrt.pop %v1994
          %v2059 = vrsqrt.pop %v1995
          %v2060 = vrsqrt.pop %v1996
          %v2061 = vrsqrt.pop %v1997
          %v2062 = vrsqrt.pop %v1998
          %v2063 = vrsqrt.pop %v1999
          %v2064 = vrsqrt.pop %v2000
          %v2065 = vrsqrt.pop %v2001
          %v2066 = vrsqrt.pop %v2002
          %v2067 = vrsqrt.pop %v2003
          %v2068 = vrsqrt.pop %v2004
          %v2069 = vrsqrt.pop %v2005
          %v2070 = vrsqrt.pop %v2006
          %v2071 = vrsqrt.pop %v2007
          %v2072 = vrsqrt.pop %v2008
          %v2073 = vrsqrt.pop %v2009
          %v2074 = vrsqrt.pop %v2010
          %v2075 = vrsqrt.pop %v2011
          %v2076 = vrsqrt.pop %v2012
          %v2077 = vrsqrt.pop %v2013
          %v2078 = vrsqrt.pop %v2014
          %v2079 = vrsqrt.pop %v2015
          %v2080 = vrsqrt.pop %v2016
          %v2081 = vrsqrt.pop %v2017
          %v2082 = vrsqrt.pop %v2018
          %v2083 = vmul.f32 %v1571, %v2019
          %v2084 = vmul.f32 %v1572, %v2020
          %v2085 = vmul.f32 %v1573, %v2021
          %v2086 = vmul.f32 %v1574, %v2022
          %v2087 = vmul.f32 %v1575, %v2023
          %v2088 = vmul.f32 %v1576, %v2024
          %v2089 = vmul.f32 %v1577, %v2025
          %v2090 = vmul.f32 %v1578, %v2026
          %v2091 = vmul.f32 %v1579, %v2027
          %v2092 = vmul.f32 %v1580, %v2028
          %v2093 = vmul.f32 %v1581, %v2029
          %v2094 = vmul.f32 %v1582, %v2030
          %v2095 = vmul.f32 %v1583, %v2031
          %v2096 = vmul.f32 %v1584, %v2032
          %v2097 = vmul.f32 %v1585, %v2033
          %v2098 = vmul.f32 %v1586, %v2034
          %v2099 = vmul.f32 %v1587, %v2035
          %v2100 = vmul.f32 %v1588, %v2036
          %v2101 = vmul.f32 %v1589, %v2037
          %v2102 = vmul.f32 %v1590, %v2038
          %v2103 = vmul.f32 %v1591, %v2039
          %v2104 = vmul.f32 %v1592, %v2040
          %v2105 = vmul.f32 %v1593, %v2041
          %v2106 = vmul.f32 %v1594, %v2042
          %v2107 = vmul.f32 %v1595, %v2043
          %v2108 = vmul.f32 %v1596, %v2044
          %v2109 = vmul.f32 %v1597, %v2045
          %v2110 = vmul.f32 %v1598, %v2046
          %v2111 = vmul.f32 %v1599, %v2047
          %v2112 = vmul.f32 %v1600, %v2048
          %v2113 = vmul.f32 %v1601, %v2049
          %v2114 = vmul.f32 %v1602, %v2050
          %v2115 = vmul.f32 %v1603, %v2051
          %v2116 = vmul.f32 %v1604, %v2052
          %v2117 = vmul.f32 %v1605, %v2053
          %v2118 = vmul.f32 %v1606, %v2054
          %v2119 = vmul.f32 %v1607, %v2055
          %v2120 = vmul.f32 %v1608, %v2056
          %v2121 = vmul.f32 %v1609, %v2057
          %v2122 = vmul.f32 %v1610, %v2058
          %v2123 = vmul.f32 %v1611, %v2059
          %v2124 = vmul.f32 %v1612, %v2060
          %v2125 = vmul.f32 %v1613, %v2061
          %v2126 = vmul.f32 %v1614, %v2062
          %v2127 = vmul.f32 %v1615, %v2063
          %v2128 = vmul.f32 %v1616, %v2064
          %v2129 = vmul.f32 %v1617, %v2065
          %v2130 = vmul.f32 %v1618, %v2066
          %v2131 = vmul.f32 %v1619, %v2067
          %v2132 = vmul.f32 %v1620, %v2068
          %v2133 = vmul.f32 %v1621, %v2069
          %v2134 = vmul.f32 %v1622, %v2070
          %v2135 = vmul.f32 %v1623, %v2071
          %v2136 = vmul.f32 %v1624, %v2072
          %v2137 = vmul.f32 %v1625, %v2073
          %v2138 = vmul.f32 %v1626, %v2074
          %v2139 = vmul.f32 %v1627, %v2075
          %v2140 = vmul.f32 %v1628, %v2076
          %v2141 = vmul.f32 %v1629, %v2077
          %v2142 = vmul.f32 %v1630, %v2078
          %v2143 = vmul.f32 %v1631, %v2079
          %v2144 = vmul.f32 %v1632, %v2080
          %v2145 = vmul.f32 %v1633, %v2081
          %v2146 = vmul.f32 %v1634, %v2082
          %v2147 = vld [vmem:[%s3] sm:$0x1]
          %v2149 = vlaneseq
          %v2150 = vshrl.u32 %v2149, 7
          %v2151 = vsub.s32 0, %v2150
          %v2152 = vrot.slane %v2147, %v2151
          %v2154 = vmul.f32 %v2083, %v2152
          %v2155 = vmul.f32 %v2084, %v2152
          %v2156 = vmul.f32 %v2085, %v2152
          %v2157 = vmul.f32 %v2086, %v2152
          %v2158 = vmul.f32 %v2087, %v2152
          %v2159 = vmul.f32 %v2088, %v2152
          %v2160 = vmul.f32 %v2089, %v2152
          %v2161 = vmul.f32 %v2090, %v2152
          %v2162 = vmul.f32 %v2091, %v2152
          %v2163 = vmul.f32 %v2092, %v2152
          %v2164 = vmul.f32 %v2093, %v2152
          %v2165 = vmul.f32 %v2094, %v2152
          %v2166 = vmul.f32 %v2095, %v2152
          %v2167 = vmul.f32 %v2096, %v2152
          %v2168 = vmul.f32 %v2097, %v2152
          %v2169 = vmul.f32 %v2098, %v2152
          %v2170 = vmul.f32 %v2099, %v2152
          %v2171 = vmul.f32 %v2100, %v2152
          %v2172 = vmul.f32 %v2101, %v2152
          %v2173 = vmul.f32 %v2102, %v2152
          %v2174 = vmul.f32 %v2103, %v2152
          %v2175 = vmul.f32 %v2104, %v2152
          %v2176 = vmul.f32 %v2105, %v2152
          %v2177 = vmul.f32 %v2106, %v2152
          %v2178 = vmul.f32 %v2107, %v2152
          %v2179 = vmul.f32 %v2108, %v2152
          %v2180 = vmul.f32 %v2109, %v2152
          %v2181 = vmul.f32 %v2110, %v2152
          %v2182 = vmul.f32 %v2111, %v2152
          %v2183 = vmul.f32 %v2112, %v2152
          %v2184 = vmul.f32 %v2113, %v2152
          %v2185 = vmul.f32 %v2114, %v2152
          %v2186 = vmul.f32 %v2115, %v2152
          %v2187 = vmul.f32 %v2116, %v2152
          %v2188 = vmul.f32 %v2117, %v2152
          %v2189 = vmul.f32 %v2118, %v2152
          %v2190 = vmul.f32 %v2119, %v2152
          %v2191 = vmul.f32 %v2120, %v2152
          %v2192 = vmul.f32 %v2121, %v2152
          %v2193 = vmul.f32 %v2122, %v2152
          %v2194 = vmul.f32 %v2123, %v2152
          %v2195 = vmul.f32 %v2124, %v2152
          %v2196 = vmul.f32 %v2125, %v2152
          %v2197 = vmul.f32 %v2126, %v2152
          %v2198 = vmul.f32 %v2127, %v2152
          %v2199 = vmul.f32 %v2128, %v2152
          %v2200 = vmul.f32 %v2129, %v2152
          %v2201 = vmul.f32 %v2130, %v2152
          %v2202 = vmul.f32 %v2131, %v2152
          %v2203 = vmul.f32 %v2132, %v2152
          %v2204 = vmul.f32 %v2133, %v2152
          %v2205 = vmul.f32 %v2134, %v2152
          %v2206 = vmul.f32 %v2135, %v2152
          %v2207 = vmul.f32 %v2136, %v2152
          %v2208 = vmul.f32 %v2137, %v2152
          %v2209 = vmul.f32 %v2138, %v2152
          %v2210 = vmul.f32 %v2139, %v2152
          %v2211 = vmul.f32 %v2140, %v2152
          %v2212 = vmul.f32 %v2141, %v2152
          %v2213 = vmul.f32 %v2142, %v2152
          %v2214 = vmul.f32 %v2143, %v2152
          %v2215 = vmul.f32 %v2144, %v2152
          %v2216 = vmul.f32 %v2145, %v2152
          %v2217 = vmul.f32 %v2146, %v2152
          %v2218 = vld [vmem:[%s4] sm:$0x1]
          %v2220 = vlaneseq
          %v2221 = vshrl.u32 %v2220, 7
          %v2222 = vsub.s32 0, %v2221
          %v2223 = vrot.slane %v2218, %v2222
          %v2225 = vadd.f32 %v2154, %v2223
          %v2226 = vadd.f32 %v2155, %v2223
          %v2227 = vadd.f32 %v2156, %v2223
          %v2228 = vadd.f32 %v2157, %v2223
          %v2229 = vadd.f32 %v2158, %v2223
          %v2230 = vadd.f32 %v2159, %v2223
          %v2231 = vadd.f32 %v2160, %v2223
          %v2232 = vadd.f32 %v2161, %v2223
          %v2233 = vadd.f32 %v2162, %v2223
          %v2234 = vadd.f32 %v2163, %v2223
          %v2235 = vadd.f32 %v2164, %v2223
          %v2236 = vadd.f32 %v2165, %v2223
          %v2237 = vadd.f32 %v2166, %v2223
          %v2238 = vadd.f32 %v2167, %v2223
          %v2239 = vadd.f32 %v2168, %v2223
          %v2240 = vadd.f32 %v2169, %v2223
          %v2241 = vadd.f32 %v2170, %v2223
          %v2242 = vadd.f32 %v2171, %v2223
          %v2243 = vadd.f32 %v2172, %v2223
          %v2244 = vadd.f32 %v2173, %v2223
          %v2245 = vadd.f32 %v2174, %v2223
          %v2246 = vadd.f32 %v2175, %v2223
          %v2247 = vadd.f32 %v2176, %v2223
          %v2248 = vadd.f32 %v2177, %v2223
          %v2249 = vadd.f32 %v2178, %v2223
          %v2250 = vadd.f32 %v2179, %v2223
          %v2251 = vadd.f32 %v2180, %v2223
          %v2252 = vadd.f32 %v2181, %v2223
          %v2253 = vadd.f32 %v2182, %v2223
          %v2254 = vadd.f32 %v2183, %v2223
          %v2255 = vadd.f32 %v2184, %v2223
          %v2256 = vadd.f32 %v2185, %v2223
          %v2257 = vadd.f32 %v2186, %v2223
          %v2258 = vadd.f32 %v2187, %v2223
          %v2259 = vadd.f32 %v2188, %v2223
          %v2260 = vadd.f32 %v2189, %v2223
          %v2261 = vadd.f32 %v2190, %v2223
          %v2262 = vadd.f32 %v2191, %v2223
          %v2263 = vadd.f32 %v2192, %v2223
          %v2264 = vadd.f32 %v2193, %v2223
          %v2265 = vadd.f32 %v2194, %v2223
          %v2266 = vadd.f32 %v2195, %v2223
          %v2267 = vadd.f32 %v2196, %v2223
          %v2268 = vadd.f32 %v2197, %v2223
          %v2269 = vadd.f32 %v2198, %v2223
          %v2270 = vadd.f32 %v2199, %v2223
          %v2271 = vadd.f32 %v2200, %v2223
          %v2272 = vadd.f32 %v2201, %v2223
          %v2273 = vadd.f32 %v2202, %v2223
          %v2274 = vadd.f32 %v2203, %v2223
          %v2275 = vadd.f32 %v2204, %v2223
          %v2276 = vadd.f32 %v2205, %v2223
          %v2277 = vadd.f32 %v2206, %v2223
          %v2278 = vadd.f32 %v2207, %v2223
          %v2279 = vadd.f32 %v2208, %v2223
          %v2280 = vadd.f32 %v2209, %v2223
          %v2281 = vadd.f32 %v2210, %v2223
          %v2282 = vadd.f32 %v2211, %v2223
          %v2283 = vadd.f32 %v2212, %v2223
          %v2284 = vadd.f32 %v2213, %v2223
          %v2285 = vadd.f32 %v2214, %v2223
          %v2286 = vadd.f32 %v2215, %v2223
          %v2287 = vadd.f32 %v2216, %v2223
          %v2288 = vadd.f32 %v2217, %v2223
          %2289 = vst.msk [vmem:[%s254] sm:$0xff] %vm1111, %v2225
          %2290 = vst.msk [vmem:[%s254 + $0x8] sm:$0xff] %vm1111, %v2226
          %2291 = vst.msk [vmem:[%s254 + $0x10] sm:$0xff] %vm1111, %v2227
          %2292 = vst.msk [vmem:[%s254 + $0x18] sm:$0xff] %vm1111, %v2228
          %2293 = vst.msk [vmem:[%s254 + $0x20] sm:$0xff] %vm1111, %v2229
          %2294 = vst.msk [vmem:[%s254 + $0x28] sm:$0xff] %vm1111, %v2230
          %2295 = vst.msk [vmem:[%s254 + $0x30] sm:$0xff] %vm1111, %v2231
          %2296 = vst.msk [vmem:[%s254 + $0x38] sm:$0xff] %vm1111, %v2232
          %2297 = vst.msk [vmem:[%s254 + $0x40] sm:$0xff] %vm1111, %v2233
          %2298 = vst.msk [vmem:[%s254 + $0x48] sm:$0xff] %vm1111, %v2234
          %2299 = vst.msk [vmem:[%s254 + $0x50] sm:$0xff] %vm1111, %v2235
          %2300 = vst.msk [vmem:[%s254 + $0x58] sm:$0xff] %vm1111, %v2236
          %2301 = vst.msk [vmem:[%s254 + $0x60] sm:$0xff] %vm1111, %v2237
          %2302 = vst.msk [vmem:[%s254 + $0x68] sm:$0xff] %vm1111, %v2238
          %2303 = vst.msk [vmem:[%s254 + $0x70] sm:$0xff] %vm1111, %v2239
          %2304 = vst.msk [vmem:[%s254 + $0x78] sm:$0xff] %vm1111, %v2240
          %2305 = vst.msk [vmem:[%s254 + $0x80] sm:$0xff] %vm1111, %v2241
          %2306 = vst.msk [vmem:[%s254 + $0x88] sm:$0xff] %vm1111, %v2242
          %2307 = vst.msk [vmem:[%s254 + $0x90] sm:$0xff] %vm1111, %v2243
          %2308 = vst.msk [vmem:[%s254 + $0x98] sm:$0xff] %vm1111, %v2244
          %2309 = vst.msk [vmem:[%s254 + $0xa0] sm:$0xff] %vm1111, %v2245
          %2310 = vst.msk [vmem:[%s254 + $0xa8] sm:$0xff] %vm1111, %v2246
          %2311 = vst.msk [vmem:[%s254 + $0xb0] sm:$0xff] %vm1111, %v2247
          %2312 = vst.msk [vmem:[%s254 + $0xb8] sm:$0xff] %vm1111, %v2248
          %2313 = vst.msk [vmem:[%s254 + $0xc0] sm:$0xff] %vm1111, %v2249
          %2314 = vst.msk [vmem:[%s254 + $0xc8] sm:$0xff] %vm1111, %v2250
          %2315 = vst.msk [vmem:[%s254 + $0xd0] sm:$0xff] %vm1111, %v2251
          %2316 = vst.msk [vmem:[%s254 + $0xd8] sm:$0xff] %vm1111, %v2252
          %2317 = vst.msk [vmem:[%s254 + $0xe0] sm:$0xff] %vm1111, %v2253
          %2318 = vst.msk [vmem:[%s254 + $0xe8] sm:$0xff] %vm1111, %v2254
          %2319 = vst.msk [vmem:[%s254 + $0xf0] sm:$0xff] %vm1111, %v2255
          %2320 = vst.msk [vmem:[%s254 + $0xf8] sm:$0xff] %vm1111, %v2256
          %2321 = vst.msk [vmem:[%s254 + $0x100] sm:$0xff] %vm1111, %v2257
          %2322 = vst.msk [vmem:[%s254 + $0x108] sm:$0xff] %vm1111, %v2258
          %2323 = vst.msk [vmem:[%s254 + $0x110] sm:$0xff] %vm1111, %v2259
          %2324 = vst.msk [vmem:[%s254 + $0x118] sm:$0xff] %vm1111, %v2260
          %2325 = vst.msk [vmem:[%s254 + $0x120] sm:$0xff] %vm1111, %v2261
          %2326 = vst.msk [vmem:[%s254 + $0x128] sm:$0xff] %vm1111, %v2262
          %2327 = vst.msk [vmem:[%s254 + $0x130] sm:$0xff] %vm1111, %v2263
          %2328 = vst.msk [vmem:[%s254 + $0x138] sm:$0xff] %vm1111, %v2264
          %2329 = vst.msk [vmem:[%s254 + $0x140] sm:$0xff] %vm1111, %v2265
          %2330 = vst.msk [vmem:[%s254 + $0x148] sm:$0xff] %vm1111, %v2266
          %2331 = vst.msk [vmem:[%s254 + $0x150] sm:$0xff] %vm1111, %v2267
          %2332 = vst.msk [vmem:[%s254 + $0x158] sm:$0xff] %vm1111, %v2268
          %2333 = vst.msk [vmem:[%s254 + $0x160] sm:$0xff] %vm1111, %v2269
          %2334 = vst.msk [vmem:[%s254 + $0x168] sm:$0xff] %vm1111, %v2270
          %2335 = vst.msk [vmem:[%s254 + $0x170] sm:$0xff] %vm1111, %v2271
          %2336 = vst.msk [vmem:[%s254 + $0x178] sm:$0xff] %vm1111, %v2272
          %2337 = vst.msk [vmem:[%s254 + $0x180] sm:$0xff] %vm1111, %v2273
          %2338 = vst.msk [vmem:[%s254 + $0x188] sm:$0xff] %vm1111, %v2274
          %2339 = vst.msk [vmem:[%s254 + $0x190] sm:$0xff] %vm1111, %v2275
          %2340 = vst.msk [vmem:[%s254 + $0x198] sm:$0xff] %vm1111, %v2276
          %2341 = vst.msk [vmem:[%s254 + $0x1a0] sm:$0xff] %vm1111, %v2277
          %2342 = vst.msk [vmem:[%s254 + $0x1a8] sm:$0xff] %vm1111, %v2278
          %2343 = vst.msk [vmem:[%s254 + $0x1b0] sm:$0xff] %vm1111, %v2279
          %2344 = vst.msk [vmem:[%s254 + $0x1b8] sm:$0xff] %vm1111, %v2280
          %2345 = vst.msk [vmem:[%s254 + $0x1c0] sm:$0xff] %vm1111, %v2281
          %2346 = vst.msk [vmem:[%s254 + $0x1c8] sm:$0xff] %vm1111, %v2282
          %2347 = vst.msk [vmem:[%s254 + $0x1d0] sm:$0xff] %vm1111, %v2283
          %2348 = vst.msk [vmem:[%s254 + $0x1d8] sm:$0xff] %vm1111, %v2284
          %2349 = vst.msk [vmem:[%s254 + $0x1e0] sm:$0xff] %vm1111, %v2285
          %2350 = vst.msk [vmem:[%s254 + $0x1e8] sm:$0xff] %vm1111, %v2286
          %2351 = vst.msk [vmem:[%s254 + $0x1f0] sm:$0xff] %vm1111, %v2287
          %2352 = vst.msk [vmem:[%s254 + $0x1f8] sm:$0xff] %vm1111, %v2288
        $region48: #{patch_embed_forward.1} parent=39 // pred_fallthru
          _
        %s2353 = sand.u32 %s156, 1
        %s2354 = scalar_lea.sflag [#allocation4], %s2353
        %s2355 = sand.u32 %s156, 1
        %s2356 = smul.addr %s2355, 512
        %s2357 = scalar_lea.vmem [#allocation3], %s2356
        // Predicated region
        $region49: #{patch_embed_forward.1} parent=39 // pred_check
          %p2358 = pneg %p166
        $region50: #{patch_embed_forward.1} parent=39 // pred_check_branch
          %2360 = sbr.rel (%p2358) target = $region52
        $region51: #{patch_embed_forward.1} parent=39 // pred_region
          %s2361 = smul.u32 64, %s23
          %s2363 = ssub.s32 8192, 8192
          %2364 = vsyncadd %s2354, %s2363
          %s2365 = smul.addr %s2361, 128
          %s2366 = scalar_lea.hbm %s5, %s2365
          %s2367 = sshll.u32 %s2357, 4
          %s2368 = int_to_ptr.vmem [resolvable:$true] %s2367
          %2373 = dma.vmem_to_hbm [thread:$0]  %s2368, 8192, %s2366, %s2354, 128, 128, 8
        $region52: #{patch_embed_forward.1} parent=39 // pred_fallthru
          _
      $region40: #{patch_embed_forward.1} parent=5 // pred_fallthru
        _
      %p2374 = scmp.le.s32.totalorder 2, %s14
      // Predicated region
      $region53: #{patch_embed_forward.1} parent=5 // pred_check
        %p2375 = pneg %p2374
      $region54: #{patch_embed_forward.1} parent=5 // pred_check_branch
        %2377 = sbr.rel (%p2375) target = $region56
      $region55: #{patch_embed_forward.1} parent=5 // pred_region
        %s2378 = ssub.s32 %s14, 2
        // Predicated region
        $region57: #{patch_embed_forward.1} parent=55 // pred_check
          %p2379 = pneg %p172
        $region58: #{patch_embed_forward.1} parent=55 // pred_check_branch
          %2381 = sbr.rel (%p2379) target = $region60
        $region59: #{patch_embed_forward.1} parent=55 // pred_region
          %s2382 = sand.u32 %s157, 1
          %s2383 = scalar_lea.sflag [#allocation4], %s2382
          %s2384 = sand.u32 %s157, 1
          %s2385 = smul.addr %s2384, 512
          %s2386 = scalar_lea.vmem [#allocation3], %s2385
          %2387 = dma.done %s2383, 8192
        $region60: #{patch_embed_forward.1} parent=55 // pred_fallthru
          _
      $region56: #{patch_embed_forward.1} parent=5 // pred_fallthru
        _
    $region6: #{patch_embed_forward.1} parent=1 // loop_footer
      %s18 = sadd.s32 1, %s14
    $region7: #{patch_embed_forward.1} parent=1 // loop_footer_branch
      %13 = sbr.rel target = $region3
    $region8: #{patch_embed_forward.1} parent=1 // loop_exit
      _
    %2388 = vsyncpa [#allocation4], 1
    %s2389 = scalar_lea.sflag [#allocation4], 1
    %2390 = vsyncpa %s2389, 1

</llo_original>
